<compile_context>
chip_gen: v5e
topology: v5e:2x2
jax: 0.10.0
libtpu: 0.0.40
codegen_flags: <defaults>
</compile_context>

<pallas_src>
import jax
import jax.numpy as jnp
from jax.experimental import pallas as pl
from jax.experimental.pallas import tpu as pltpu


def make_cbam_kernel(Nb, C, HW, shifts):
    """shifts: tuple of K*K static lane shifts, one per conv tap."""

    def kernel(x_ref, w1t_ref, w2t_ref, mw_ref, bias_ref, out_ref, fc_ref):
        x = x_ref[...].astype(jnp.float32)                       # (Nb, C, HW)

        # ---------------- channel attention (batched over the block) --------
        ch_max = jnp.max(x, axis=2)                              # (Nb, C)
        ch_avg = jnp.sum(x, axis=2) * (1.0 / HW)                 # (Nb, C)
        pooled = jnp.concatenate([ch_max, ch_avg], axis=0)       # (2*Nb, C)

        # Shared MLP; branches folded through the (bias-free, linear) 2nd layer:
        #   relu(max@W1.T)@W2.T + relu(avg@W1.T)@W2.T
        #     == (relu(max@W1.T) + relu(avg@W1.T)) @ W2.T
        h = jnp.maximum(
            jnp.dot(pooled, w1t_ref[...],
                    preferred_element_type=jnp.float32), 0.0)    # (2*Nb, CR)
        u = h[:Nb] + h[Nb:]                                      # (Nb, CR)
        mc = jax.nn.sigmoid(
            jnp.dot(u, w2t_ref[...],
                    preferred_element_type=jnp.float32))         # (Nb, C)

        # ---------------- f' = Mc * x, staged in VMEM ----------------
        fc_ref[...] = x * mc.reshape(Nb, C, 1)                   # (Nb, C, HW)

        # ---------------- spatial attention ----------------
        f_c = fc_ref[...]
        sp_max = jnp.max(f_c, axis=1)                            # (Nb, HW)
        sp_avg = jnp.sum(f_c, axis=1) * (1.0 / C)                # (Nb, HW)
        # one stacked tile: rows [0:Nb) = max maps, rows [Nb:2Nb) = avg maps
        stack = jnp.concatenate([sp_max, sp_avg], axis=0)        # (2*Nb, HW)

        # KxK "same" conv, fully unrolled.  Per tap: one lane roll (XLU) and
        # one multiply-add against the precomputed masked-weight slab row.
        acc = None
        for t, shift in enumerate(shifts):
            rolled = stack if shift == 0 else pltpu.roll(stack, shift, axis=1)
            term = rolled * mw_ref[t]                            # (2*Nb, HW)
            acc = term if acc is None else acc + term

        conv = acc[:Nb] + acc[Nb:] + bias_ref[0]                 # (Nb, HW)
        sp_att = jax.nn.sigmoid(conv)

        # ---------------- residual combine: out = Ms * f' + x ----------------
        out_ref[...] = (fc_ref[...] * sp_att.reshape(Nb, 1, HW)
                        + x_ref[...].astype(jnp.float32)).astype(out_ref.dtype)

    return kernel


def cbam_pallas(x, w1, w2, conv_w, conv_b, *, block_bytes_target=4 * 1024 * 1024):
    """x: (N,C,H,W); w1: (C//r, C); w2: (C, C//r); conv_w: (1,2,K,K); conv_b: (1,)."""
    N, C, H, W = x.shape
    HW = H * W
    K = conv_w.shape[-1]
    KK = K * K
    P = (K - 1) // 2
    CR = w1.shape[0]

    # lane-dense view: (N, C, H*W) so the minor axis maps onto full lane groups
    xf = x.reshape(N, C, HW)

    # ---- pick the per-grid-step batch block ----
    # cap at N//2 so the grid always has >= 2 steps (both v7x TensorCores busy);
    # budget the x block and the masked-weight slab so v7x's 64 MiB VMEM holds
    # double buffers comfortably.
    elem_bytes = C * HW * x.dtype.itemsize
    max_nb = max(1, N // 2)
    Nb = 1
    for cand in range(1, max_nb + 1):
        if N % cand != 0:
            continue
        if cand * elem_bytes > block_bytes_target:
            continue
        if cand * 2 * KK * HW * 4 > 8 * 1024 * 1024:     # masked-weight budget
            continue
        Nb = cand

    # ---- precompute masked conv weights (weights x "same"-padding masks) ----
    pidx = jnp.arange(HW, dtype=jnp.int32)
    hh = pidx // W
    ww = pidx % W
    wm = conv_w[0, 0].reshape(KK).astype(jnp.float32)    # taps for the "max" map
    wa = conv_w[0, 1].reshape(KK).astype(jnp.float32)    # taps for the "avg" map
    masks = []
    shifts = []
    for dy in range(K):
        oy = dy - P
        for dx in range(K):
            ox = dx - P
            valid = ((hh + oy >= 0) & (hh + oy < H) &
                     (ww + ox >= 0) & (ww + ox < W))
            masks.append(valid.astype(jnp.float32))
            shifts.append((-(oy * W + ox)) % HW)         # rolled[p] = map[p + s]
    masks = jnp.stack(masks)                             # (KK, HW)
    mw = jnp.stack([wm[:, None] * masks,                 # rows for "max" branch
                    wa[:, None] * masks], axis=1)        # rows for "avg" branch
    mw = jnp.broadcast_to(mw[:, :, None, :], (KK, 2, Nb, HW)).reshape(KK, 2 * Nb, HW)

    kernel = make_cbam_kernel(Nb, C, HW, tuple(shifts))

    out = pl.pallas_call(
        kernel,
        out_shape=jax.ShapeDtypeStruct((N, C, HW), x.dtype),
        grid=(N // Nb,),
        in_specs=[
            pl.BlockSpec((Nb, C, HW), lambda i: (i, 0, 0)),      # x block
            pl.BlockSpec((C, CR), lambda i: (0, 0)),             # W1.T
            pl.BlockSpec((CR, C), lambda i: (0, 0)),             # W2.T
            pl.BlockSpec((KK, 2 * Nb, HW), lambda i: (0, 0, 0)), # masked weights
            pl.BlockSpec(memory_space=pltpu.MemorySpace.SMEM),   # conv bias
        ],
        out_specs=pl.BlockSpec((Nb, C, HW), lambda i: (i, 0, 0)),
        scratch_shapes=[pltpu.VMEM((Nb, C, HW), jnp.float32)],   # f' staging
        compiler_params=pltpu.CompilerParams(
            dimension_semantics=("parallel",),        # batch axis across TCs
            vmem_limit_bytes=48 * 1024 * 1024,        # fits v5e/v6e/v7x
        ),
    )(xf,
      w1.T.astype(jnp.float32),
      w2.T.astype(jnp.float32),
      mw,
      conv_b.reshape(1).astype(jnp.float32))

    return out.reshape(N, C, H, W)


def cbam_reference(x, w1, w2, conv_w, conv_b):
    """Plain-JAX reference mirroring the PyTorch CBAM forward."""
    ch_max = jnp.max(x, axis=(2, 3))                 # (N, C)
    ch_avg = jnp.mean(x, axis=(2, 3))                # (N, C)

    def mlp(v):                                      # nn.Linear: y = v @ W.T
        return jnp.maximum(v @ w1.T, 0.0) @ w2.T

    mc = jax.nn.sigmoid(mlp(ch_max) + mlp(ch_avg))[:, :, None, None]
    f_c = mc * x

    sp_max = jnp.max(f_c, axis=1, keepdims=True)
    sp_avg = jnp.mean(f_c, axis=1, keepdims=True)
    cat = jnp.concatenate([sp_max, sp_avg], axis=1)  # (N, 2, H, W)
    P = (conv_w.shape[-1] - 1) // 2
    conv = jax.lax.conv_general_dilated(
        cat, conv_w, window_strides=(1, 1), padding=[(P, P), (P, P)],
        dimension_numbers=("NCHW", "OIHW", "NCHW"),
    ) + conv_b
    sp = jax.nn.sigmoid(conv)
    return sp * f_c + x


if __name__ == "__main__":
    N, C, H, W = 2, 16, 16, 16
    reduction = 8
    K = 7
    CR = C // reduction

    key = jax.random.PRNGKey(0)
    kx, k1, k2, k3, k4 = jax.random.split(key, 5)
    x = jax.random.normal(kx, (N, C, H, W), dtype=jnp.float32)
    # ChannelAttention MLP: Linear(C -> C//r, bias=False), Linear(C//r -> C, bias=False)
    w1 = jax.random.normal(k1, (CR, C), dtype=jnp.float32) * 0.3
    w2 = jax.random.normal(k2, (C, CR), dtype=jnp.float32) * 0.3
    # SpatialAttention conv: Conv2d(2 -> 1, kernel_size=K, padding=(K-1)//2)
    conv_w = jax.random.normal(k3, (1, 2, K, K), dtype=jnp.float32) * 0.2
    conv_b = jax.random.normal(k4, (1,), dtype=jnp.float32) * 0.1

    out = cbam_pallas(x, w1, w2, conv_w, conv_b)
    out = jax.block_until_ready(out)

    ref = cbam_reference(x, w1, w2, conv_w, conv_b)
    if not jnp.allclose(out, ref, atol=1e-4, rtol=1e-4):
        raise AssertionError(
            f"mismatch: max abs err {float(jnp.max(jnp.abs(out - ref)))}"
        )
    print("KERNEL_OK")
</pallas_src>

<mosaic_0001>
module attributes {stable_mosaic.version = 11 : i64} {
  func.func @kernel(%arg0: i32, %arg1: memref<1x16x256xf32, #tpu.memory_space<vmem>>, %arg2: memref<16x2xf32, #tpu.memory_space<vmem>>, %arg3: memref<2x16xf32, #tpu.memory_space<vmem>>, %arg4: memref<49x2x256xf32, #tpu.memory_space<vmem>>, %arg5: memref<1xf32, #tpu.memory_space<smem>>, %arg6: memref<1x16x256xf32, #tpu.memory_space<vmem>>, %arg7: memref<1x16x256xf32, #tpu.memory_space<vmem>>) attributes {dimension_semantics = [#tpu.dimension_semantics<parallel>], iteration_bounds = array<i64: 2>, scalar_prefetch = 0 : i64, scratch_operands = 1 : i64, tpu.core_type = #tpu.core_type<tc>, window_params = [{transform_indices = @transform_0, window_bounds = array<i64: 1, 16, 256>}, {pipeline_mode = #tpu.pipeline_mode<synchronous>, transform_indices = @transform_1, window_bounds = array<i64: 16, 2>}, {pipeline_mode = #tpu.pipeline_mode<synchronous>, transform_indices = @transform_2, window_bounds = array<i64: 2, 16>}, {pipeline_mode = #tpu.pipeline_mode<synchronous>, transform_indices = @transform_3, window_bounds = array<i64: 49, 2, 256>}, {transform_indices = @transform_4, window_bounds = array<i64: 1>}, {transform_indices = @transform_5, window_bounds = array<i64: 1, 16, 256>}]} {
    %c0 = arith.constant 0 : index
    %c0_0 = arith.constant 0 : index
    %c0_1 = arith.constant 0 : index
    %0 = vector.load %arg1[%c0, %c0_0, %c0_1] : memref<1x16x256xf32, #tpu.memory_space<vmem>>, vector<1x16x256xf32>
    %cst = arith.constant dense<0xFF800000> : vector<1x16xf32>
    %1 = vector.multi_reduction <maximumf>, %0, %cst [2] : vector<1x16x256xf32> to vector<1x16xf32>
    %cst_2 = arith.constant dense<0.000000e+00> : vector<1x16xf32>
    %2 = vector.multi_reduction <add>, %0, %cst_2 [2] : vector<1x16x256xf32> to vector<1x16xf32>
    %cst_3 = arith.constant 3.906250e-03 : f32
    %3 = vector.broadcast %cst_3 : f32 to vector<1x16xf32>
    %4 = arith.mulf %2, %3 : vector<1x16xf32>
    %5 = tpu.concatenate %1, %4 in 0 : vector<1x16xf32>, vector<1x16xf32> -> vector<2x16xf32>
    %c0_4 = arith.constant 0 : index
    %c0_5 = arith.constant 0 : index
    %6 = vector.load %arg2[%c0_4, %c0_5] : memref<16x2xf32, #tpu.memory_space<vmem>>, vector<16x2xf32>
    %cst_6 = arith.constant dense<0.000000e+00> : vector<2x2xf32>
    %7 = tpu.matmul %5, %6, %cst_6 {dimension_numbers = #tpu.dot_dimension_numbers<[1], [0], [0], [1], [0, 0, 1, 1], [], []>} : vector<2x16xf32>, vector<16x2xf32>, vector<2x2xf32> -> vector<2x2xf32>
    %cst_7 = arith.constant 0.000000e+00 : f32
    %8 = vector.broadcast %cst_7 : f32 to vector<2x2xf32>
    %9 = arith.maximumf %7, %8 : vector<2x2xf32>
    %10 = vector.extract_strided_slice %9 {offsets = [0, 0], sizes = [1, 2], strides = [1, 1]} : vector<2x2xf32> to vector<1x2xf32>
    %11 = vector.extract_strided_slice %9 {offsets = [1, 0], sizes = [1, 2], strides = [1, 1]} : vector<2x2xf32> to vector<1x2xf32>
    %12 = arith.addf %10, %11 : vector<1x2xf32>
    %c0_8 = arith.constant 0 : index
    %c0_9 = arith.constant 0 : index
    %13 = vector.load %arg3[%c0_8, %c0_9] : memref<2x16xf32, #tpu.memory_space<vmem>>, vector<2x16xf32>
    %cst_10 = arith.constant dense<0.000000e+00> : vector<1x16xf32>
    %14 = tpu.matmul %12, %13, %cst_10 {dimension_numbers = #tpu.dot_dimension_numbers<[1], [0], [0], [1], [0, 0, 1, 1], [], []>} : vector<1x2xf32>, vector<2x16xf32>, vector<1x16xf32> -> vector<1x16xf32>
    %15 = arith.negf %14 : vector<1x16xf32>
    %16 = math.exp %15 : vector<1x16xf32>
    %cst_11 = arith.constant 1.000000e+00 : f32
    %17 = vector.broadcast %cst_11 : f32 to vector<1x16xf32>
    %18 = arith.addf %17, %16 : vector<1x16xf32>
    %19 = arith.divf %17, %18 : vector<1x16xf32>
    %20 = vector.shape_cast %19 : vector<1x16xf32> to vector<1x16x1xf32>
    %21 = vector.broadcast %20 : vector<1x16x1xf32> to vector<1x16x256xf32>
    %22 = arith.mulf %0, %21 : vector<1x16x256xf32>
    %c0_12 = arith.constant 0 : index
    %c0_13 = arith.constant 0 : index
    %c0_14 = arith.constant 0 : index
    %23 = vector.load %arg7[%c0_12, %c0_13, %c0_14] : memref<1x16x256xf32, #tpu.memory_space<vmem>>, vector<1x16x256xf32>
    tpu.vector_store %arg7[%c0_12, %c0_13, %c0_14], %22 {strides = array<i32>} : memref<1x16x256xf32, #tpu.memory_space<vmem>>, vector<1x16x256xf32>,
    %c0_15 = arith.constant 0 : index
    %c0_16 = arith.constant 0 : index
    %c0_17 = arith.constant 0 : index
    %24 = vector.load %arg7[%c0_15, %c0_16, %c0_17] : memref<1x16x256xf32, #tpu.memory_space<vmem>>, vector<1x16x256xf32>
    %cst_18 = arith.constant dense<0xFF800000> : vector<1x256xf32>
    %25 = vector.multi_reduction <maximumf>, %24, %cst_18 [1] : vector<1x16x256xf32> to vector<1x256xf32>
    %cst_19 = arith.constant dense<0.000000e+00> : vector<1x256xf32>
    %26 = vector.multi_reduction <add>, %24, %cst_19 [1] : vector<1x16x256xf32> to vector<1x256xf32>
    %cst_20 = arith.constant 6.250000e-02 : f32
    %27 = vector.broadcast %cst_20 : f32 to vector<1x256xf32>
    %28 = arith.mulf %26, %27 : vector<1x256xf32>
    %29 = tpu.concatenate %25, %28 in 0 : vector<1x256xf32>, vector<1x256xf32> -> vector<2x256xf32>
    %c51_i32 = arith.constant 51 : i32
    %30 = tpu.dynamic_rotate %29 by %c51_i32 dim 1 : vector<2x256xf32>, i32 -> vector<2x256xf32>
    %c0_21 = arith.constant 0 : index
    %c0_22 = arith.constant 0 : index
    %c0_23 = arith.constant 0 : index
    %31 = vector.load %arg4[%c0_21, %c0_22, %c0_23] : memref<49x2x256xf32, #tpu.memory_space<vmem>>, vector<1x2x256xf32>
    %32 = vector.shape_cast %31 : vector<1x2x256xf32> to vector<2x256xf32>
    %33 = arith.mulf %30, %32 : vector<2x256xf32>
    %c50_i32 = arith.constant 50 : i32
    %34 = tpu.dynamic_rotate %29 by %c50_i32 dim 1 : vector<2x256xf32>, i32 -> vector<2x256xf32>
    %c1 = arith.constant 1 : index
    %c0_24 = arith.constant 0 : index
    %c0_25 = arith.constant 0 : index
    %35 = vector.load %arg4[%c1, %c0_24, %c0_25] : memref<49x2x256xf32, #tpu.memory_space<vmem>>, vector<1x2x256xf32>
    %36 = vector.shape_cast %35 : vector<1x2x256xf32> to vector<2x256xf32>
    %37 = arith.mulf %34, %36 : vector<2x256xf32>
    %38 = arith.addf %33, %37 : vector<2x256xf32>
    %c49_i32 = arith.constant 49 : i32
    %39 = tpu.dynamic_rotate %29 by %c49_i32 dim 1 : vector<2x256xf32>, i32 -> vector<2x256xf32>
    %c2 = arith.constant 2 : index
    %c0_26 = arith.constant 0 : index
    %c0_27 = arith.constant 0 : index
    %40 = vector.load %arg4[%c2, %c0_26, %c0_27] : memref<49x2x256xf32, #tpu.memory_space<vmem>>, vector<1x2x256xf32>
    %41 = vector.shape_cast %40 : vector<1x2x256xf32> to vector<2x256xf32>
    %42 = arith.mulf %39, %41 : vector<2x256xf32>
    %43 = arith.addf %38, %42 : vector<2x256xf32>
    %c48_i32 = arith.constant 48 : i32
    %44 = tpu.dynamic_rotate %29 by %c48_i32 dim 1 : vector<2x256xf32>, i32 -> vector<2x256xf32>
    %c3 = arith.constant 3 : index
    %c0_28 = arith.constant 0 : index
    %c0_29 = arith.constant 0 : index
    %45 = vector.load %arg4[%c3, %c0_28, %c0_29] : memref<49x2x256xf32, #tpu.memory_space<vmem>>, vector<1x2x256xf32>
    %46 = vector.shape_cast %45 : vector<1x2x256xf32> to vector<2x256xf32>
    %47 = arith.mulf %44, %46 : vector<2x256xf32>
    %48 = arith.addf %43, %47 : vector<2x256xf32>
    %c47_i32 = arith.constant 47 : i32
    %49 = tpu.dynamic_rotate %29 by %c47_i32 dim 1 : vector<2x256xf32>, i32 -> vector<2x256xf32>
    %c4 = arith.constant 4 : index
    %c0_30 = arith.constant 0 : index
    %c0_31 = arith.constant 0 : index
    %50 = vector.load %arg4[%c4, %c0_30, %c0_31] : memref<49x2x256xf32, #tpu.memory_space<vmem>>, vector<1x2x256xf32>
    %51 = vector.shape_cast %50 : vector<1x2x256xf32> to vector<2x256xf32>
    %52 = arith.mulf %49, %51 : vector<2x256xf32>
    %53 = arith.addf %48, %52 : vector<2x256xf32>
    %c46_i32 = arith.constant 46 : i32
    %54 = tpu.dynamic_rotate %29 by %c46_i32 dim 1 : vector<2x256xf32>, i32 -> vector<2x256xf32>
    %c5 = arith.constant 5 : index
    %c0_32 = arith.constant 0 : index
    %c0_33 = arith.constant 0 : index
    %55 = vector.load %arg4[%c5, %c0_32, %c0_33] : memref<49x2x256xf32, #tpu.memory_space<vmem>>, vector<1x2x256xf32>
    %56 = vector.shape_cast %55 : vector<1x2x256xf32> to vector<2x256xf32>
    %57 = arith.mulf %54, %56 : vector<2x256xf32>
    %58 = arith.addf %53, %57 : vector<2x256xf32>
    %c45_i32 = arith.constant 45 : i32
    %59 = tpu.dynamic_rotate %29 by %c45_i32 dim 1 : vector<2x256xf32>, i32 -> vector<2x256xf32>
    %c6 = arith.constant 6 : index
    %c0_34 = arith.constant 0 : index
    %c0_35 = arith.constant 0 : index
    %60 = vector.load %arg4[%c6, %c0_34, %c0_35] : memref<49x2x256xf32, #tpu.memory_space<vmem>>, vector<1x2x256xf32>
    %61 = vector.shape_cast %60 : vector<1x2x256xf32> to vector<2x256xf32>
    %62 = arith.mulf %59, %61 : vector<2x256xf32>
    %63 = arith.addf %58, %62 : vector<2x256xf32>
    %c35_i32 = arith.constant 35 : i32
    %64 = tpu.dynamic_rotate %29 by %c35_i32 dim 1 : vector<2x256xf32>, i32 -> vector<2x256xf32>
    %c7 = arith.constant 7 : index
    %c0_36 = arith.constant 0 : index
    %c0_37 = arith.constant 0 : index
    %65 = vector.load %arg4[%c7, %c0_36, %c0_37] : memref<49x2x256xf32, #tpu.memory_space<vmem>>, vector<1x2x256xf32>
    %66 = vector.shape_cast %65 : vector<1x2x256xf32> to vector<2x256xf32>
    %67 = arith.mulf %64, %66 : vector<2x256xf32>
    %68 = arith.addf %63, %67 : vector<2x256xf32>
    %c34_i32 = arith.constant 34 : i32
    %69 = tpu.dynamic_rotate %29 by %c34_i32 dim 1 : vector<2x256xf32>, i32 -> vector<2x256xf32>
    %c8 = arith.constant 8 : index
    %c0_38 = arith.constant 0 : index
    %c0_39 = arith.constant 0 : index
    %70 = vector.load %arg4[%c8, %c0_38, %c0_39] : memref<49x2x256xf32, #tpu.memory_space<vmem>>, vector<1x2x256xf32>
    %71 = vector.shape_cast %70 : vector<1x2x256xf32> to vector<2x256xf32>
    %72 = arith.mulf %69, %71 : vector<2x256xf32>
    %73 = arith.addf %68, %72 : vector<2x256xf32>
    %c33_i32 = arith.constant 33 : i32
    %74 = tpu.dynamic_rotate %29 by %c33_i32 dim 1 : vector<2x256xf32>, i32 -> vector<2x256xf32>
    %c9 = arith.constant 9 : index
    %c0_40 = arith.constant 0 : index
    %c0_41 = arith.constant 0 : index
    %75 = vector.load %arg4[%c9, %c0_40, %c0_41] : memref<49x2x256xf32, #tpu.memory_space<vmem>>, vector<1x2x256xf32>
    %76 = vector.shape_cast %75 : vector<1x2x256xf32> to vector<2x256xf32>
    %77 = arith.mulf %74, %76 : vector<2x256xf32>
    %78 = arith.addf %73, %77 : vector<2x256xf32>
    %c32_i32 = arith.constant 32 : i32
    %79 = tpu.dynamic_rotate %29 by %c32_i32 dim 1 : vector<2x256xf32>, i32 -> vector<2x256xf32>
    %c10 = arith.constant 10 : index
    %c0_42 = arith.constant 0 : index
    %c0_43 = arith.constant 0 : index
    %80 = vector.load %arg4[%c10, %c0_42, %c0_43] : memref<49x2x256xf32, #tpu.memory_space<vmem>>, vector<1x2x256xf32>
    %81 = vector.shape_cast %80 : vector<1x2x256xf32> to vector<2x256xf32>
    %82 = arith.mulf %79, %81 : vector<2x256xf32>
    %83 = arith.addf %78, %82 : vector<2x256xf32>
    %c31_i32 = arith.constant 31 : i32
    %84 = tpu.dynamic_rotate %29 by %c31_i32 dim 1 : vector<2x256xf32>, i32 -> vector<2x256xf32>
    %c11 = arith.constant 11 : index
    %c0_44 = arith.constant 0 : index
    %c0_45 = arith.constant 0 : index
    %85 = vector.load %arg4[%c11, %c0_44, %c0_45] : memref<49x2x256xf32, #tpu.memory_space<vmem>>, vector<1x2x256xf32>
    %86 = vector.shape_cast %85 : vector<1x2x256xf32> to vector<2x256xf32>
    %87 = arith.mulf %84, %86 : vector<2x256xf32>
    %88 = arith.addf %83, %87 : vector<2x256xf32>
    %c30_i32 = arith.constant 30 : i32
    %89 = tpu.dynamic_rotate %29 by %c30_i32 dim 1 : vector<2x256xf32>, i32 -> vector<2x256xf32>
    %c12 = arith.constant 12 : index
    %c0_46 = arith.constant 0 : index
    %c0_47 = arith.constant 0 : index
    %90 = vector.load %arg4[%c12, %c0_46, %c0_47] : memref<49x2x256xf32, #tpu.memory_space<vmem>>, vector<1x2x256xf32>
    %91 = vector.shape_cast %90 : vector<1x2x256xf32> to vector<2x256xf32>
    %92 = arith.mulf %89, %91 : vector<2x256xf32>
    %93 = arith.addf %88, %92 : vector<2x256xf32>
    %c29_i32 = arith.constant 29 : i32
    %94 = tpu.dynamic_rotate %29 by %c29_i32 dim 1 : vector<2x256xf32>, i32 -> vector<2x256xf32>
    %c13 = arith.constant 13 : index
    %c0_48 = arith.constant 0 : index
    %c0_49 = arith.constant 0 : index
    %95 = vector.load %arg4[%c13, %c0_48, %c0_49] : memref<49x2x256xf32, #tpu.memory_space<vmem>>, vector<1x2x256xf32>
    %96 = vector.shape_cast %95 : vector<1x2x256xf32> to vector<2x256xf32>
    %97 = arith.mulf %94, %96 : vector<2x256xf32>
    %98 = arith.addf %93, %97 : vector<2x256xf32>
    %c19_i32 = arith.constant 19 : i32
    %99 = tpu.dynamic_rotate %29 by %c19_i32 dim 1 : vector<2x256xf32>, i32 -> vector<2x256xf32>
    %c14 = arith.constant 14 : index
    %c0_50 = arith.constant 0 : index
    %c0_51 = arith.constant 0 : index
    %100 = vector.load %arg4[%c14, %c0_50, %c0_51] : memref<49x2x256xf32, #tpu.memory_space<vmem>>, vector<1x2x256xf32>
    %101 = vector.shape_cast %100 : vector<1x2x256xf32> to vector<2x256xf32>
    %102 = arith.mulf %99, %101 : vector<2x256xf32>
    %103 = arith.addf %98, %102 : vector<2x256xf32>
    %c18_i32 = arith.constant 18 : i32
    %104 = tpu.dynamic_rotate %29 by %c18_i32 dim 1 : vector<2x256xf32>, i32 -> vector<2x256xf32>
    %c15 = arith.constant 15 : index
    %c0_52 = arith.constant 0 : index
    %c0_53 = arith.constant 0 : index
    %105 = vector.load %arg4[%c15, %c0_52, %c0_53] : memref<49x2x256xf32, #tpu.memory_space<vmem>>, vector<1x2x256xf32>
    %106 = vector.shape_cast %105 : vector<1x2x256xf32> to vector<2x256xf32>
    %107 = arith.mulf %104, %106 : vector<2x256xf32>
    %108 = arith.addf %103, %107 : vector<2x256xf32>
    %c17_i32 = arith.constant 17 : i32
    %109 = tpu.dynamic_rotate %29 by %c17_i32 dim 1 : vector<2x256xf32>, i32 -> vector<2x256xf32>
    %c16 = arith.constant 16 : index
    %c0_54 = arith.constant 0 : index
    %c0_55 = arith.constant 0 : index
    %110 = vector.load %arg4[%c16, %c0_54, %c0_55] : memref<49x2x256xf32, #tpu.memory_space<vmem>>, vector<1x2x256xf32>
    %111 = vector.shape_cast %110 : vector<1x2x256xf32> to vector<2x256xf32>
    %112 = arith.mulf %109, %111 : vector<2x256xf32>
    %113 = arith.addf %108, %112 : vector<2x256xf32>
    %c16_i32 = arith.constant 16 : i32
    %114 = tpu.dynamic_rotate %29 by %c16_i32 dim 1 : vector<2x256xf32>, i32 -> vector<2x256xf32>
    %c17 = arith.constant 17 : index
    %c0_56 = arith.constant 0 : index
    %c0_57 = arith.constant 0 : index
    %115 = vector.load %arg4[%c17, %c0_56, %c0_57] : memref<49x2x256xf32, #tpu.memory_space<vmem>>, vector<1x2x256xf32>
    %116 = vector.shape_cast %115 : vector<1x2x256xf32> to vector<2x256xf32>
    %117 = arith.mulf %114, %116 : vector<2x256xf32>
    %118 = arith.addf %113, %117 : vector<2x256xf32>
    %c15_i32 = arith.constant 15 : i32
    %119 = tpu.dynamic_rotate %29 by %c15_i32 dim 1 : vector<2x256xf32>, i32 -> vector<2x256xf32>
    %c18 = arith.constant 18 : index
    %c0_58 = arith.constant 0 : index
    %c0_59 = arith.constant 0 : index
    %120 = vector.load %arg4[%c18, %c0_58, %c0_59] : memref<49x2x256xf32, #tpu.memory_space<vmem>>, vector<1x2x256xf32>
    %121 = vector.shape_cast %120 : vector<1x2x256xf32> to vector<2x256xf32>
    %122 = arith.mulf %119, %121 : vector<2x256xf32>
    %123 = arith.addf %118, %122 : vector<2x256xf32>
    %c14_i32 = arith.constant 14 : i32
    %124 = tpu.dynamic_rotate %29 by %c14_i32 dim 1 : vector<2x256xf32>, i32 -> vector<2x256xf32>
    %c19 = arith.constant 19 : index
    %c0_60 = arith.constant 0 : index
    %c0_61 = arith.constant 0 : index
    %125 = vector.load %arg4[%c19, %c0_60, %c0_61] : memref<49x2x256xf32, #tpu.memory_space<vmem>>, vector<1x2x256xf32>
    %126 = vector.shape_cast %125 : vector<1x2x256xf32> to vector<2x256xf32>
    %127 = arith.mulf %124, %126 : vector<2x256xf32>
    %128 = arith.addf %123, %127 : vector<2x256xf32>
    %c13_i32 = arith.constant 13 : i32
    %129 = tpu.dynamic_rotate %29 by %c13_i32 dim 1 : vector<2x256xf32>, i32 -> vector<2x256xf32>
    %c20 = arith.constant 20 : index
    %c0_62 = arith.constant 0 : index
    %c0_63 = arith.constant 0 : index
    %130 = vector.load %arg4[%c20, %c0_62, %c0_63] : memref<49x2x256xf32, #tpu.memory_space<vmem>>, vector<1x2x256xf32>
    %131 = vector.shape_cast %130 : vector<1x2x256xf32> to vector<2x256xf32>
    %132 = arith.mulf %129, %131 : vector<2x256xf32>
    %133 = arith.addf %128, %132 : vector<2x256xf32>
    %c3_i32 = arith.constant 3 : i32
    %134 = tpu.dynamic_rotate %29 by %c3_i32 dim 1 : vector<2x256xf32>, i32 -> vector<2x256xf32>
    %c21 = arith.constant 21 : index
    %c0_64 = arith.constant 0 : index
    %c0_65 = arith.constant 0 : index
    %135 = vector.load %arg4[%c21, %c0_64, %c0_65] : memref<49x2x256xf32, #tpu.memory_space<vmem>>, vector<1x2x256xf32>
    %136 = vector.shape_cast %135 : vector<1x2x256xf32> to vector<2x256xf32>
    %137 = arith.mulf %134, %136 : vector<2x256xf32>
    %138 = arith.addf %133, %137 : vector<2x256xf32>
    %c2_i32 = arith.constant 2 : i32
    %139 = tpu.dynamic_rotate %29 by %c2_i32 dim 1 : vector<2x256xf32>, i32 -> vector<2x256xf32>
    %c22 = arith.constant 22 : index
    %c0_66 = arith.constant 0 : index
    %c0_67 = arith.constant 0 : index
    %140 = vector.load %arg4[%c22, %c0_66, %c0_67] : memref<49x2x256xf32, #tpu.memory_space<vmem>>, vector<1x2x256xf32>
    %141 = vector.shape_cast %140 : vector<1x2x256xf32> to vector<2x256xf32>
    %142 = arith.mulf %139, %141 : vector<2x256xf32>
    %143 = arith.addf %138, %142 : vector<2x256xf32>
    %c1_i32 = arith.constant 1 : i32
    %144 = tpu.dynamic_rotate %29 by %c1_i32 dim 1 : vector<2x256xf32>, i32 -> vector<2x256xf32>
    %c23 = arith.constant 23 : index
    %c0_68 = arith.constant 0 : index
    %c0_69 = arith.constant 0 : index
    %145 = vector.load %arg4[%c23, %c0_68, %c0_69] : memref<49x2x256xf32, #tpu.memory_space<vmem>>, vector<1x2x256xf32>
    %146 = vector.shape_cast %145 : vector<1x2x256xf32> to vector<2x256xf32>
    %147 = arith.mulf %144, %146 : vector<2x256xf32>
    %148 = arith.addf %143, %147 : vector<2x256xf32>
    %c24 = arith.constant 24 : index
    %c0_70 = arith.constant 0 : index
    %c0_71 = arith.constant 0 : index
    %149 = vector.load %arg4[%c24, %c0_70, %c0_71] : memref<49x2x256xf32, #tpu.memory_space<vmem>>, vector<1x2x256xf32>
    %150 = vector.shape_cast %149 : vector<1x2x256xf32> to vector<2x256xf32>
    %151 = arith.mulf %29, %150 : vector<2x256xf32>
    %152 = arith.addf %148, %151 : vector<2x256xf32>
    %c255_i32 = arith.constant 255 : i32
    %153 = tpu.dynamic_rotate %29 by %c255_i32 dim 1 : vector<2x256xf32>, i32 -> vector<2x256xf32>
    %c25 = arith.constant 25 : index
    %c0_72 = arith.constant 0 : index
    %c0_73 = arith.constant 0 : index
    %154 = vector.load %arg4[%c25, %c0_72, %c0_73] : memref<49x2x256xf32, #tpu.memory_space<vmem>>, vector<1x2x256xf32>
    %155 = vector.shape_cast %154 : vector<1x2x256xf32> to vector<2x256xf32>
    %156 = arith.mulf %153, %155 : vector<2x256xf32>
    %157 = arith.addf %152, %156 : vector<2x256xf32>
    %c254_i32 = arith.constant 254 : i32
    %158 = tpu.dynamic_rotate %29 by %c254_i32 dim 1 : vector<2x256xf32>, i32 -> vector<2x256xf32>
    %c26 = arith.constant 26 : index
    %c0_74 = arith.constant 0 : index
    %c0_75 = arith.constant 0 : index
    %159 = vector.load %arg4[%c26, %c0_74, %c0_75] : memref<49x2x256xf32, #tpu.memory_space<vmem>>, vector<1x2x256xf32>
    %160 = vector.shape_cast %159 : vector<1x2x256xf32> to vector<2x256xf32>
    %161 = arith.mulf %158, %160 : vector<2x256xf32>
    %162 = arith.addf %157, %161 : vector<2x256xf32>
    %c253_i32 = arith.constant 253 : i32
    %163 = tpu.dynamic_rotate %29 by %c253_i32 dim 1 : vector<2x256xf32>, i32 -> vector<2x256xf32>
    %c27 = arith.constant 27 : index
    %c0_76 = arith.constant 0 : index
    %c0_77 = arith.constant 0 : index
    %164 = vector.load %arg4[%c27, %c0_76, %c0_77] : memref<49x2x256xf32, #tpu.memory_space<vmem>>, vector<1x2x256xf32>
    %165 = vector.shape_cast %164 : vector<1x2x256xf32> to vector<2x256xf32>
    %166 = arith.mulf %163, %165 : vector<2x256xf32>
    %167 = arith.addf %162, %166 : vector<2x256xf32>
    %c243_i32 = arith.constant 243 : i32
    %168 = tpu.dynamic_rotate %29 by %c243_i32 dim 1 : vector<2x256xf32>, i32 -> vector<2x256xf32>
    %c28 = arith.constant 28 : index
    %c0_78 = arith.constant 0 : index
    %c0_79 = arith.constant 0 : index
    %169 = vector.load %arg4[%c28, %c0_78, %c0_79] : memref<49x2x256xf32, #tpu.memory_space<vmem>>, vector<1x2x256xf32>
    %170 = vector.shape_cast %169 : vector<1x2x256xf32> to vector<2x256xf32>
    %171 = arith.mulf %168, %170 : vector<2x256xf32>
    %172 = arith.addf %167, %171 : vector<2x256xf32>
    %c242_i32 = arith.constant 242 : i32
    %173 = tpu.dynamic_rotate %29 by %c242_i32 dim 1 : vector<2x256xf32>, i32 -> vector<2x256xf32>
    %c29 = arith.constant 29 : index
    %c0_80 = arith.constant 0 : index
    %c0_81 = arith.constant 0 : index
    %174 = vector.load %arg4[%c29, %c0_80, %c0_81] : memref<49x2x256xf32, #tpu.memory_space<vmem>>, vector<1x2x256xf32>
    %175 = vector.shape_cast %174 : vector<1x2x256xf32> to vector<2x256xf32>
    %176 = arith.mulf %173, %175 : vector<2x256xf32>
    %177 = arith.addf %172, %176 : vector<2x256xf32>
    %c241_i32 = arith.constant 241 : i32
    %178 = tpu.dynamic_rotate %29 by %c241_i32 dim 1 : vector<2x256xf32>, i32 -> vector<2x256xf32>
    %c30 = arith.constant 30 : index
    %c0_82 = arith.constant 0 : index
    %c0_83 = arith.constant 0 : index
    %179 = vector.load %arg4[%c30, %c0_82, %c0_83] : memref<49x2x256xf32, #tpu.memory_space<vmem>>, vector<1x2x256xf32>
    %180 = vector.shape_cast %179 : vector<1x2x256xf32> to vector<2x256xf32>
    %181 = arith.mulf %178, %180 : vector<2x256xf32>
    %182 = arith.addf %177, %181 : vector<2x256xf32>
    %c240_i32 = arith.constant 240 : i32
    %183 = tpu.dynamic_rotate %29 by %c240_i32 dim 1 : vector<2x256xf32>, i32 -> vector<2x256xf32>
    %c31 = arith.constant 31 : index
    %c0_84 = arith.constant 0 : index
    %c0_85 = arith.constant 0 : index
    %184 = vector.load %arg4[%c31, %c0_84, %c0_85] : memref<49x2x256xf32, #tpu.memory_space<vmem>>, vector<1x2x256xf32>
    %185 = vector.shape_cast %184 : vector<1x2x256xf32> to vector<2x256xf32>
    %186 = arith.mulf %183, %185 : vector<2x256xf32>
    %187 = arith.addf %182, %186 : vector<2x256xf32>
    %c239_i32 = arith.constant 239 : i32
    %188 = tpu.dynamic_rotate %29 by %c239_i32 dim 1 : vector<2x256xf32>, i32 -> vector<2x256xf32>
    %c32 = arith.constant 32 : index
    %c0_86 = arith.constant 0 : index
    %c0_87 = arith.constant 0 : index
    %189 = vector.load %arg4[%c32, %c0_86, %c0_87] : memref<49x2x256xf32, #tpu.memory_space<vmem>>, vector<1x2x256xf32>
    %190 = vector.shape_cast %189 : vector<1x2x256xf32> to vector<2x256xf32>
    %191 = arith.mulf %188, %190 : vector<2x256xf32>
    %192 = arith.addf %187, %191 : vector<2x256xf32>
    %c238_i32 = arith.constant 238 : i32
    %193 = tpu.dynamic_rotate %29 by %c238_i32 dim 1 : vector<2x256xf32>, i32 -> vector<2x256xf32>
    %c33 = arith.constant 33 : index
    %c0_88 = arith.constant 0 : index
    %c0_89 = arith.constant 0 : index
    %194 = vector.load %arg4[%c33, %c0_88, %c0_89] : memref<49x2x256xf32, #tpu.memory_space<vmem>>, vector<1x2x256xf32>
    %195 = vector.shape_cast %194 : vector<1x2x256xf32> to vector<2x256xf32>
    %196 = arith.mulf %193, %195 : vector<2x256xf32>
    %197 = arith.addf %192, %196 : vector<2x256xf32>
    %c237_i32 = arith.constant 237 : i32
    %198 = tpu.dynamic_rotate %29 by %c237_i32 dim 1 : vector<2x256xf32>, i32 -> vector<2x256xf32>
    %c34 = arith.constant 34 : index
    %c0_90 = arith.constant 0 : index
    %c0_91 = arith.constant 0 : index
    %199 = vector.load %arg4[%c34, %c0_90, %c0_91] : memref<49x2x256xf32, #tpu.memory_space<vmem>>, vector<1x2x256xf32>
    %200 = vector.shape_cast %199 : vector<1x2x256xf32> to vector<2x256xf32>
    %201 = arith.mulf %198, %200 : vector<2x256xf32>
    %202 = arith.addf %197, %201 : vector<2x256xf32>
    %c227_i32 = arith.constant 227 : i32
    %203 = tpu.dynamic_rotate %29 by %c227_i32 dim 1 : vector<2x256xf32>, i32 -> vector<2x256xf32>
    %c35 = arith.constant 35 : index
    %c0_92 = arith.constant 0 : index
    %c0_93 = arith.constant 0 : index
    %204 = vector.load %arg4[%c35, %c0_92, %c0_93] : memref<49x2x256xf32, #tpu.memory_space<vmem>>, vector<1x2x256xf32>
    %205 = vector.shape_cast %204 : vector<1x2x256xf32> to vector<2x256xf32>
    %206 = arith.mulf %203, %205 : vector<2x256xf32>
    %207 = arith.addf %202, %206 : vector<2x256xf32>
    %c226_i32 = arith.constant 226 : i32
    %208 = tpu.dynamic_rotate %29 by %c226_i32 dim 1 : vector<2x256xf32>, i32 -> vector<2x256xf32>
    %c36 = arith.constant 36 : index
    %c0_94 = arith.constant 0 : index
    %c0_95 = arith.constant 0 : index
    %209 = vector.load %arg4[%c36, %c0_94, %c0_95] : memref<49x2x256xf32, #tpu.memory_space<vmem>>, vector<1x2x256xf32>
    %210 = vector.shape_cast %209 : vector<1x2x256xf32> to vector<2x256xf32>
    %211 = arith.mulf %208, %210 : vector<2x256xf32>
    %212 = arith.addf %207, %211 : vector<2x256xf32>
    %c225_i32 = arith.constant 225 : i32
    %213 = tpu.dynamic_rotate %29 by %c225_i32 dim 1 : vector<2x256xf32>, i32 -> vector<2x256xf32>
    %c37 = arith.constant 37 : index
    %c0_96 = arith.constant 0 : index
    %c0_97 = arith.constant 0 : index
    %214 = vector.load %arg4[%c37, %c0_96, %c0_97] : memref<49x2x256xf32, #tpu.memory_space<vmem>>, vector<1x2x256xf32>
    %215 = vector.shape_cast %214 : vector<1x2x256xf32> to vector<2x256xf32>
    %216 = arith.mulf %213, %215 : vector<2x256xf32>
    %217 = arith.addf %212, %216 : vector<2x256xf32>
    %c224_i32 = arith.constant 224 : i32
    %218 = tpu.dynamic_rotate %29 by %c224_i32 dim 1 : vector<2x256xf32>, i32 -> vector<2x256xf32>
    %c38 = arith.constant 38 : index
    %c0_98 = arith.constant 0 : index
    %c0_99 = arith.constant 0 : index
    %219 = vector.load %arg4[%c38, %c0_98, %c0_99] : memref<49x2x256xf32, #tpu.memory_space<vmem>>, vector<1x2x256xf32>
    %220 = vector.shape_cast %219 : vector<1x2x256xf32> to vector<2x256xf32>
    %221 = arith.mulf %218, %220 : vector<2x256xf32>
    %222 = arith.addf %217, %221 : vector<2x256xf32>
    %c223_i32 = arith.constant 223 : i32
    %223 = tpu.dynamic_rotate %29 by %c223_i32 dim 1 : vector<2x256xf32>, i32 -> vector<2x256xf32>
    %c39 = arith.constant 39 : index
    %c0_100 = arith.constant 0 : index
    %c0_101 = arith.constant 0 : index
    %224 = vector.load %arg4[%c39, %c0_100, %c0_101] : memref<49x2x256xf32, #tpu.memory_space<vmem>>, vector<1x2x256xf32>
    %225 = vector.shape_cast %224 : vector<1x2x256xf32> to vector<2x256xf32>
    %226 = arith.mulf %223, %225 : vector<2x256xf32>
    %227 = arith.addf %222, %226 : vector<2x256xf32>
    %c222_i32 = arith.constant 222 : i32
    %228 = tpu.dynamic_rotate %29 by %c222_i32 dim 1 : vector<2x256xf32>, i32 -> vector<2x256xf32>
    %c40 = arith.constant 40 : index
    %c0_102 = arith.constant 0 : index
    %c0_103 = arith.constant 0 : index
    %229 = vector.load %arg4[%c40, %c0_102, %c0_103] : memref<49x2x256xf32, #tpu.memory_space<vmem>>, vector<1x2x256xf32>
    %230 = vector.shape_cast %229 : vector<1x2x256xf32> to vector<2x256xf32>
    %231 = arith.mulf %228, %230 : vector<2x256xf32>
    %232 = arith.addf %227, %231 : vector<2x256xf32>
    %c221_i32 = arith.constant 221 : i32
    %233 = tpu.dynamic_rotate %29 by %c221_i32 dim 1 : vector<2x256xf32>, i32 -> vector<2x256xf32>
    %c41 = arith.constant 41 : index
    %c0_104 = arith.constant 0 : index
    %c0_105 = arith.constant 0 : index
    %234 = vector.load %arg4[%c41, %c0_104, %c0_105] : memref<49x2x256xf32, #tpu.memory_space<vmem>>, vector<1x2x256xf32>
    %235 = vector.shape_cast %234 : vector<1x2x256xf32> to vector<2x256xf32>
    %236 = arith.mulf %233, %235 : vector<2x256xf32>
    %237 = arith.addf %232, %236 : vector<2x256xf32>
    %c211_i32 = arith.constant 211 : i32
    %238 = tpu.dynamic_rotate %29 by %c211_i32 dim 1 : vector<2x256xf32>, i32 -> vector<2x256xf32>
    %c42 = arith.constant 42 : index
    %c0_106 = arith.constant 0 : index
    %c0_107 = arith.constant 0 : index
    %239 = vector.load %arg4[%c42, %c0_106, %c0_107] : memref<49x2x256xf32, #tpu.memory_space<vmem>>, vector<1x2x256xf32>
    %240 = vector.shape_cast %239 : vector<1x2x256xf32> to vector<2x256xf32>
    %241 = arith.mulf %238, %240 : vector<2x256xf32>
    %242 = arith.addf %237, %241 : vector<2x256xf32>
    %c210_i32 = arith.constant 210 : i32
    %243 = tpu.dynamic_rotate %29 by %c210_i32 dim 1 : vector<2x256xf32>, i32 -> vector<2x256xf32>
    %c43 = arith.constant 43 : index
    %c0_108 = arith.constant 0 : index
    %c0_109 = arith.constant 0 : index
    %244 = vector.load %arg4[%c43, %c0_108, %c0_109] : memref<49x2x256xf32, #tpu.memory_space<vmem>>, vector<1x2x256xf32>
    %245 = vector.shape_cast %244 : vector<1x2x256xf32> to vector<2x256xf32>
    %246 = arith.mulf %243, %245 : vector<2x256xf32>
    %247 = arith.addf %242, %246 : vector<2x256xf32>
    %c209_i32 = arith.constant 209 : i32
    %248 = tpu.dynamic_rotate %29 by %c209_i32 dim 1 : vector<2x256xf32>, i32 -> vector<2x256xf32>
    %c44 = arith.constant 44 : index
    %c0_110 = arith.constant 0 : index
    %c0_111 = arith.constant 0 : index
    %249 = vector.load %arg4[%c44, %c0_110, %c0_111] : memref<49x2x256xf32, #tpu.memory_space<vmem>>, vector<1x2x256xf32>
    %250 = vector.shape_cast %249 : vector<1x2x256xf32> to vector<2x256xf32>
    %251 = arith.mulf %248, %250 : vector<2x256xf32>
    %252 = arith.addf %247, %251 : vector<2x256xf32>
    %c208_i32 = arith.constant 208 : i32
    %253 = tpu.dynamic_rotate %29 by %c208_i32 dim 1 : vector<2x256xf32>, i32 -> vector<2x256xf32>
    %c45 = arith.constant 45 : index
    %c0_112 = arith.constant 0 : index
    %c0_113 = arith.constant 0 : index
    %254 = vector.load %arg4[%c45, %c0_112, %c0_113] : memref<49x2x256xf32, #tpu.memory_space<vmem>>, vector<1x2x256xf32>
    %255 = vector.shape_cast %254 : vector<1x2x256xf32> to vector<2x256xf32>
    %256 = arith.mulf %253, %255 : vector<2x256xf32>
    %257 = arith.addf %252, %256 : vector<2x256xf32>
    %c207_i32 = arith.constant 207 : i32
    %258 = tpu.dynamic_rotate %29 by %c207_i32 dim 1 : vector<2x256xf32>, i32 -> vector<2x256xf32>
    %c46 = arith.constant 46 : index
    %c0_114 = arith.constant 0 : index
    %c0_115 = arith.constant 0 : index
    %259 = vector.load %arg4[%c46, %c0_114, %c0_115] : memref<49x2x256xf32, #tpu.memory_space<vmem>>, vector<1x2x256xf32>
    %260 = vector.shape_cast %259 : vector<1x2x256xf32> to vector<2x256xf32>
    %261 = arith.mulf %258, %260 : vector<2x256xf32>
    %262 = arith.addf %257, %261 : vector<2x256xf32>
    %c206_i32 = arith.constant 206 : i32
    %263 = tpu.dynamic_rotate %29 by %c206_i32 dim 1 : vector<2x256xf32>, i32 -> vector<2x256xf32>
    %c47 = arith.constant 47 : index
    %c0_116 = arith.constant 0 : index
    %c0_117 = arith.constant 0 : index
    %264 = vector.load %arg4[%c47, %c0_116, %c0_117] : memref<49x2x256xf32, #tpu.memory_space<vmem>>, vector<1x2x256xf32>
    %265 = vector.shape_cast %264 : vector<1x2x256xf32> to vector<2x256xf32>
    %266 = arith.mulf %263, %265 : vector<2x256xf32>
    %267 = arith.addf %262, %266 : vector<2x256xf32>
    %c205_i32 = arith.constant 205 : i32
    %268 = tpu.dynamic_rotate %29 by %c205_i32 dim 1 : vector<2x256xf32>, i32 -> vector<2x256xf32>
    %c48 = arith.constant 48 : index
    %c0_118 = arith.constant 0 : index
    %c0_119 = arith.constant 0 : index
    %269 = vector.load %arg4[%c48, %c0_118, %c0_119] : memref<49x2x256xf32, #tpu.memory_space<vmem>>, vector<1x2x256xf32>
    %270 = vector.shape_cast %269 : vector<1x2x256xf32> to vector<2x256xf32>
    %271 = arith.mulf %268, %270 : vector<2x256xf32>
    %272 = arith.addf %267, %271 : vector<2x256xf32>
    %273 = vector.extract_strided_slice %272 {offsets = [0, 0], sizes = [1, 256], strides = [1, 1]} : vector<2x256xf32> to vector<1x256xf32>
    %274 = vector.extract_strided_slice %272 {offsets = [1, 0], sizes = [1, 256], strides = [1, 1]} : vector<2x256xf32> to vector<1x256xf32>
    %275 = arith.addf %273, %274 : vector<1x256xf32>
    %c0_120 = arith.constant 0 : index
    %276 = memref.load %arg5[%c0_120] : memref<1xf32, #tpu.memory_space<smem>>
    %277 = vector.broadcast %276 : f32 to vector<1x256xf32>
    %278 = arith.addf %275, %277 : vector<1x256xf32>
    %279 = arith.negf %278 : vector<1x256xf32>
    %280 = math.exp %279 : vector<1x256xf32>
    %cst_121 = arith.constant 1.000000e+00 : f32
    %281 = vector.broadcast %cst_121 : f32 to vector<1x256xf32>
    %282 = arith.addf %281, %280 : vector<1x256xf32>
    %283 = arith.divf %281, %282 : vector<1x256xf32>
    %c0_122 = arith.constant 0 : index
    %c0_123 = arith.constant 0 : index
    %c0_124 = arith.constant 0 : index
    %284 = vector.load %arg7[%c0_122, %c0_123, %c0_124] : memref<1x16x256xf32, #tpu.memory_space<vmem>>, vector<1x16x256xf32>
    %285 = vector.shape_cast %283 : vector<1x256xf32> to vector<1x1x256xf32>
    %286 = vector.broadcast %285 : vector<1x1x256xf32> to vector<1x16x256xf32>
    %287 = arith.mulf %284, %286 : vector<1x16x256xf32>
    %c0_125 = arith.constant 0 : index
    %c0_126 = arith.constant 0 : index
    %c0_127 = arith.constant 0 : index
    %288 = vector.load %arg1[%c0_125, %c0_126, %c0_127] : memref<1x16x256xf32, #tpu.memory_space<vmem>>, vector<1x16x256xf32>
    %289 = arith.addf %287, %288 : vector<1x16x256xf32>
    %c0_128 = arith.constant 0 : index
    %c0_129 = arith.constant 0 : index
    %c0_130 = arith.constant 0 : index
    %290 = vector.load %arg6[%c0_128, %c0_129, %c0_130] : memref<1x16x256xf32, #tpu.memory_space<vmem>>, vector<1x16x256xf32>
    tpu.vector_store %arg6[%c0_128, %c0_129, %c0_130], %289 {strides = array<i32>} : memref<1x16x256xf32, #tpu.memory_space<vmem>>, vector<1x16x256xf32>,
    return
  }
  func.func @transform_0(%arg0: i32) -> (i32, i32, i32) {
    %c0_i32 = arith.constant 0 : i32
    %c0_i32_0 = arith.constant 0 : i32
    %c0_i32_1 = arith.constant 0 : i32
    return %arg0, %c0_i32, %c0_i32_0 : i32, i32, i32
  }
  func.func @transform_1(%arg0: i32) -> (i32, i32) {
    %c0_i32 = arith.constant 0 : i32
    %c0_i32_0 = arith.constant 0 : i32
    %c0_i32_1 = arith.constant 0 : i32
    return %c0_i32, %c0_i32_0 : i32, i32
  }
  func.func @transform_2(%arg0: i32) -> (i32, i32) {
    %c0_i32 = arith.constant 0 : i32
    %c0_i32_0 = arith.constant 0 : i32
    %c0_i32_1 = arith.constant 0 : i32
    return %c0_i32, %c0_i32_0 : i32, i32
  }
  func.func @transform_3(%arg0: i32) -> (i32, i32, i32) {
    %c0_i32 = arith.constant 0 : i32
    %c0_i32_0 = arith.constant 0 : i32
    %c0_i32_1 = arith.constant 0 : i32
    %c0_i32_2 = arith.constant 0 : i32
    return %c0_i32, %c0_i32_0, %c0_i32_1 : i32, i32, i32
  }
  func.func @transform_4(%arg0: i32) -> i32 {
    %c0_i32 = arith.constant 0 : i32
    %c0_i32_0 = arith.constant 0 : i32
    return %c0_i32 : i32
  }
  func.func @transform_5(%arg0: i32) -> (i32, i32, i32) {
    %c0_i32 = arith.constant 0 : i32
    %c0_i32_0 = arith.constant 0 : i32
    %c0_i32_1 = arith.constant 0 : i32
    return %arg0, %c0_i32, %c0_i32_0 : i32, i32, i32
  }
}

</mosaic_0001>

<llo_original>
// kernel: tpu_custom_call.1
$region0: #{tpu_custom_call.1}
  #allocation0 [shape = 'u32[]', space=smem, size = 0x4, offset = 0x4, fixed_abs, tag = 'smem constant byte address 0x4 - core index']
  #allocation1 [shape = 'u32[72,128]{1,0:T(1,128)}', space=vmem, size = 0x9000, scoped, tag = 'internal scratch']
  #allocation2 [shape = 'f32[1,16,256]{2,1,0:T(8,128)}', space=vmem, size = 0x4000, scoped, tag = 'scratch operand']
  #allocation3 [shape = 'f32[1]{0:T(128)S(6)}', space=smem, size = 0x200, scoped, tag = 'scoped memory for tpu_custom_call.1']
  %s0 = inlined_call_operand.hbm [shape: f32[2,16,256], index: 0, kind: input, shape index: {}]
  %s1 = inlined_call_operand.vmem [shape: f32[16,2], index: 1, kind: input, shape index: {}]
  %s2 = inlined_call_operand.vmem [shape: f32[2,16], index: 2, kind: input, shape index: {}]
  %s3 = inlined_call_operand.hbm [shape: f32[49,2,256], index: 3, kind: input, shape index: {}]
  %s4 = inlined_call_operand.<no memory space> [shape: f32[1], index: 4, kind: input, shape index: {}]
  %s5 = inlined_call_operand.hbm [shape: f32[2,16,256], index: 5, kind: output, shape index: {}]
  %s6 = sld [smem:[#allocation0]]
  $region61: #{tpu_custom_call.1} parent=0
    _
  %s8 = ssub.s32 1, %s6
  %s9 = scalar_select 0, %s8, %s6
  %10 = sst [smem:[#allocation3]] %s4
  $region1: #{tpu_custom_call.1} parent=0
    #allocation4 [shape = 'u8[32768]{0}', space=vmem, size = 0x8000, scoped, tag = 'input window, operand 0']
    #allocation5 [shape = 's32[2]{0}', space=sflag, size = 0x8, scoped, tag = 'scoped memory for tpu_custom_call.1']
    #allocation6 [shape = 's32[2]{0}', space=sflag, size = 0x8, scoped, tag = 'scoped memory for tpu_custom_call.1']
    #allocation7 [shape = 'u8[100352]{0}', space=vmem, size = 0x18800, scoped, tag = 'input window, operand 3, single buffered']
    #allocation8 [shape = 's32[1]{0}', space=sflag, size = 0x4, scoped, tag = 'scoped memory for tpu_custom_call.1']
    #allocation9 [shape = 'u8[32768]{0}', space=vmem, size = 0x8000, scoped, tag = 'output window, operand 0']
    %11 = vsyncpa [#allocation5], 0
    %s12 = scalar_lea.sflag [#allocation5], 1
    %13 = vsyncpa %s12, 0
    %14 = vsyncpa [#allocation8], 0
    %15 = vsyncpa [#allocation6], 0
    %s16 = scalar_lea.sflag [#allocation6], 1
    %17 = vsyncpa %s16, 0
    loop: start=0, step=1, limit=4
    $region2: #{tpu_custom_call.1} parent=1 // loop_pre_header
      _
    $region3: #{tpu_custom_call.1} parent=1 // loop_header
      %s19 = sphi 0, %s23
      %p20 = scmp.ge.s32.totalorder %s19, 4
      %s29 = sphi 0, %s31
      %s32 = sphi 0, %s29
      %s33 = sphi 0, %s32
      %s49 = sphi 0, %s33
      %s53 = sphi 0, %s53
      %s55 = sphi 0, %s53
      %s56 = sphi 0, %s55
      %s70 = sphi 0, %s56
      %s74 = sphi 0, %s74
      %s76 = sphi 0, %s74
      %s77 = sphi 0, %s76
      %s91 = sphi 0, %s77
      %s95 = sphi 0, %s95
      %s97 = sphi 0, %s95
      %s98 = sphi 0, %s97
      %s112 = sphi 0, %s98
      %s116 = sphi 0, %s116
      %s118 = sphi 0, %s116
      %s119 = sphi 0, %s118
      %s133 = sphi 0, %s119
      %s139 = sphi 0, %s141
      %s142 = sphi 0, %s139
      %s143 = sphi 0, %s142
      %s159 = sphi 0, %s143
    $region4: #{tpu_custom_call.1} parent=1 // loop_header_branch
      %22 = sbr.rel (%p20) target = $region8
    $region5: #{tpu_custom_call.1} parent=1 // loop_body
      %s24 = ssub.s32 %s19, 1
      %s25 = ssub.s32 %s19, 2
      %s26 = sadd.s32 %s19, 1
      %s27 = ssub.s32 %s19, %s26
      %p28 = scmp.eq.s32.totalorder %s27, 0
      %s30 = sadd.s32 %s29, 1
      %s31 = scalar_select %p28, %s29, %s30
      %p34 = pneg %p28
      %p35 = scmp.eq.s32.totalorder %s19, 1
      %p36 = por %p34, %p35
      %p37 = scmp.ne.s32.totalorder %s29, %s32
      %p38 = scmp.eq.s32.totalorder %s19, 0
      %p39 = por %p37, %p38
      %p40 = scmp.ne.s32.totalorder %s29, %s32
      %p41 = scmp.eq.s32.totalorder %s24, 1
      %p42 = por %p40, %p41
      %p43 = scmp.ne.s32.totalorder %s32, %s33
      %p44 = scmp.eq.s32.totalorder %s24, 0
      %p45 = por %p43, %p44
      %p46 = scmp.ne.s32.totalorder %s32, %s33
      %p47 = scmp.eq.s32.totalorder %s25, 1
      %p48 = por %p46, %p47
      %p50 = scmp.ne.s32.totalorder %s33, %s49
      %p51 = scmp.eq.s32.totalorder %s25, 0
      %p52 = por %p50, %p51
      %s54 = sadd.s32 %s53, 1
      %p57 = scmp.eq.s32.totalorder %s19, 1
      %p58 = scmp.ne.s32.totalorder %s53, %s55
      %p59 = scmp.eq.s32.totalorder %s19, 0
      %p60 = por %p58, %p59
      %p61 = scmp.ne.s32.totalorder %s53, %s55
      %p62 = scmp.eq.s32.totalorder %s24, 1
      %p63 = por %p61, %p62
      %p64 = scmp.ne.s32.totalorder %s55, %s56
      %p65 = scmp.eq.s32.totalorder %s24, 0
      %p66 = por %p64, %p65
      %p67 = scmp.ne.s32.totalorder %s55, %s56
      %p68 = scmp.eq.s32.totalorder %s25, 1
      %p69 = por %p67, %p68
      %p71 = scmp.ne.s32.totalorder %s56, %s70
      %p72 = scmp.eq.s32.totalorder %s25, 0
      %p73 = por %p71, %p72
      %s75 = sadd.s32 %s74, 1
      %p78 = scmp.eq.s32.totalorder %s19, 1
      %p79 = scmp.ne.s32.totalorder %s74, %s76
      %p80 = scmp.eq.s32.totalorder %s19, 0
      %p81 = por %p79, %p80
      %p82 = scmp.ne.s32.totalorder %s74, %s76
      %p83 = scmp.eq.s32.totalorder %s24, 1
      %p84 = por %p82, %p83
      %p85 = scmp.ne.s32.totalorder %s76, %s77
      %p86 = scmp.eq.s32.totalorder %s24, 0
      %p87 = por %p85, %p86
      %p88 = scmp.ne.s32.totalorder %s76, %s77
      %p89 = scmp.eq.s32.totalorder %s25, 1
      %p90 = por %p88, %p89
      %p92 = scmp.ne.s32.totalorder %s77, %s91
      %p93 = scmp.eq.s32.totalorder %s25, 0
      %p94 = por %p92, %p93
      %s96 = sadd.s32 %s95, 1
      %p99 = scmp.eq.s32.totalorder %s19, 1
      %p100 = scmp.ne.s32.totalorder %s95, %s97
      %p101 = scmp.eq.s32.totalorder %s19, 0
      %p102 = por %p100, %p101
      %p103 = scmp.ne.s32.totalorder %s95, %s97
      %p104 = scmp.eq.s32.totalorder %s24, 1
      %p105 = por %p103, %p104
      %p106 = scmp.ne.s32.totalorder %s97, %s98
      %p107 = scmp.eq.s32.totalorder %s24, 0
      %p108 = por %p106, %p107
      %p109 = scmp.ne.s32.totalorder %s97, %s98
      %p110 = scmp.eq.s32.totalorder %s25, 1
      %p111 = por %p109, %p110
      %p113 = scmp.ne.s32.totalorder %s98, %s112
      %p114 = scmp.eq.s32.totalorder %s25, 0
      %p115 = por %p113, %p114
      %s117 = sadd.s32 %s116, 1
      %p120 = scmp.eq.s32.totalorder %s19, 1
      %p121 = scmp.ne.s32.totalorder %s116, %s118
      %p122 = scmp.eq.s32.totalorder %s19, 0
      %p123 = por %p121, %p122
      %p124 = scmp.ne.s32.totalorder %s116, %s118
      %p125 = scmp.eq.s32.totalorder %s24, 1
      %p126 = por %p124, %p125
      %p127 = scmp.ne.s32.totalorder %s118, %s119
      %p128 = scmp.eq.s32.totalorder %s24, 0
      %p129 = por %p127, %p128
      %p130 = scmp.ne.s32.totalorder %s118, %s119
      %p131 = scmp.eq.s32.totalorder %s25, 1
      %p132 = por %p130, %p131
      %p134 = scmp.ne.s32.totalorder %s119, %s133
      %p135 = scmp.eq.s32.totalorder %s25, 0
      %p136 = por %p134, %p135
      %s137 = ssub.s32 %s19, %s26
      %p138 = scmp.eq.s32.totalorder %s137, 0
      %s140 = sadd.s32 %s139, 1
      %s141 = scalar_select %p138, %s139, %s140
      %p144 = pneg %p138
      %p145 = scmp.eq.s32.totalorder %s19, 1
      %p146 = por %p144, %p145
      %p147 = scmp.ne.s32.totalorder %s139, %s142
      %p148 = scmp.eq.s32.totalorder %s19, 0
      %p149 = por %p147, %p148
      %p150 = scmp.ne.s32.totalorder %s139, %s142
      %p151 = scmp.eq.s32.totalorder %s24, 1
      %p152 = por %p150, %p151
      %p153 = scmp.ne.s32.totalorder %s142, %s143
      %p154 = scmp.eq.s32.totalorder %s24, 0
      %p155 = por %p153, %p154
      %p156 = scmp.ne.s32.totalorder %s142, %s143
      %p157 = scmp.eq.s32.totalorder %s25, 1
      %p158 = por %p156, %p157
      %p160 = scmp.ne.s32.totalorder %s143, %s159
      %p161 = scmp.eq.s32.totalorder %s25, 0
      %p162 = por %p160, %p161
      %p163 = scmp.le.s32.totalorder 1, %s19
      %p164 = scmp.lt.s32.totalorder %s19, 3
      %p165 = pnand %p163, %p164
      %p166 = pneg %p165
      // Predicated region
      $region9: #{tpu_custom_call.1} parent=5 // pred_check
        _
      $region10: #{tpu_custom_call.1} parent=5 // pred_check_branch
        %168 = sbr.rel (%p165) target = $region12
      $region11: #{tpu_custom_call.1} parent=5 // pred_region
        %s169 = ssub.s32 %s19, 1
        // Predicated region
        $region13: #{tpu_custom_call.1} parent=11 // pred_check
          %p170 = pneg %p66
        $region14: #{tpu_custom_call.1} parent=11 // pred_check_branch
          %172 = sbr.rel (%p170) target = $region16
        $region15: #{tpu_custom_call.1} parent=11 // pred_region
          _
        $region16: #{tpu_custom_call.1} parent=11 // pred_fallthru
          _
        // Predicated region
        $region17: #{tpu_custom_call.1} parent=11 // pred_check
          %p173 = pneg %p87
        $region18: #{tpu_custom_call.1} parent=11 // pred_check_branch
          %175 = sbr.rel (%p173) target = $region20
        $region19: #{tpu_custom_call.1} parent=11 // pred_region
          _
        $region20: #{tpu_custom_call.1} parent=11 // pred_fallthru
          _
        // Predicated region
        $region21: #{tpu_custom_call.1} parent=11 // pred_check
          %p176 = pneg %p108
        $region22: #{tpu_custom_call.1} parent=11 // pred_check_branch
          %178 = sbr.rel (%p176) target = $region24
        $region23: #{tpu_custom_call.1} parent=11 // pred_region
          %180 = vsyncadd [#allocation8], 0
          %s181 = sshll.u32 %s3, 4
          %s182 = int_to_ptr.hbm [resolvable:$true] %s181
          %s183 = sshll.u32 [#allocation7], 4
          %s184 = int_to_ptr.vmem [resolvable:$true] %s183
          %189 = dma.hbm_to_vmem [thread:$0]  %s182, 3136, %s184, [#allocation8], 64, 64, 4
        $region24: #{tpu_custom_call.1} parent=11 // pred_fallthru
          _
        // Predicated region
        $region25: #{tpu_custom_call.1} parent=11 // pred_check
          %p190 = pneg %p129
        $region26: #{tpu_custom_call.1} parent=11 // pred_check_branch
          %192 = sbr.rel (%p190) target = $region28
        $region27: #{tpu_custom_call.1} parent=11 // pred_region
          _
        $region28: #{tpu_custom_call.1} parent=11 // pred_fallthru
          _
      $region12: #{tpu_custom_call.1} parent=5 // pred_fallthru
        _
      %p193 = scmp.lt.s32.totalorder %s19, 2
      // Predicated region
      $region29: #{tpu_custom_call.1} parent=5 // pred_check
        %p194 = pneg %p193
      $region30: #{tpu_custom_call.1} parent=5 // pred_check_branch
        %196 = sbr.rel (%p194) target = $region32
      $region31: #{tpu_custom_call.1} parent=5 // pred_region
        // Predicated region
        $region33: #{tpu_custom_call.1} parent=31 // pred_check
          %p197 = pneg %p39
        $region34: #{tpu_custom_call.1} parent=31 // pred_check_branch
          %199 = sbr.rel (%p197) target = $region36
        $region35: #{tpu_custom_call.1} parent=31 // pred_region
          %s200 = sand.u32 %s29, 1
          %s201 = scalar_lea.sflag [#allocation5], %s200
          %s202 = sand.u32 %s29, 1
          %s203 = smul.addr %s202, 32
          %s204 = scalar_lea.vmem [#allocation4], %s203
          %206 = vsyncadd %s201, 0
          %s207 = smul.addr %s19, 4
          %s208 = smul.addr %s207, 8
          %s209 = scalar_lea.hbm %s0, %s208
          %s210 = sshll.u32 %s209, 4
          %s211 = int_to_ptr.hbm [resolvable:$true] %s210
          %s212 = sshll.u32 %s204, 4
          %s213 = int_to_ptr.vmem [resolvable:$true] %s212
          %218 = dma.hbm_to_vmem [thread:$0]  %s211, 512, %s213, %s201, 256, 256, 16
        $region36: #{tpu_custom_call.1} parent=31 // pred_fallthru
          _
      $region32: #{tpu_custom_call.1} parent=5 // pred_fallthru
        _
      %p219 = scmp.le.s32.totalorder 1, %s19
      %p220 = scmp.lt.s32.totalorder %s19, 3
      %p221 = pnand %p219, %p220
      %p222 = pneg %p221
      // Predicated region
      $region37: #{tpu_custom_call.1} parent=5 // pred_check
        _
      $region38: #{tpu_custom_call.1} parent=5 // pred_check_branch
        %224 = sbr.rel (%p221) target = $region40
      $region39: #{tpu_custom_call.1} parent=5 // pred_region
        %s225 = ssub.s32 %s19, 1
        %s226 = sand.u32 %s32, 1
        %s227 = scalar_lea.sflag [#allocation5], %s226
        %s228 = sand.u32 %s32, 1
        %s229 = smul.addr %s228, 32
        %s230 = scalar_lea.vmem [#allocation4], %s229
        // Predicated region
        $region41: #{tpu_custom_call.1} parent=39 // pred_check
          %p231 = pneg %p45
        $region42: #{tpu_custom_call.1} parent=39 // pred_check_branch
          %233 = sbr.rel (%p231) target = $region44
        $region43: #{tpu_custom_call.1} parent=39 // pred_region
          %235 = dma.done %s227, 512
        $region44: #{tpu_custom_call.1} parent=39 // pred_fallthru
          _
        // Predicated region
        $region45: #{tpu_custom_call.1} parent=39 // pred_check
          %p236 = pneg %p108
        $region46: #{tpu_custom_call.1} parent=39 // pred_check_branch
          %238 = sbr.rel (%p236) target = $region48
        $region47: #{tpu_custom_call.1} parent=39 // pred_region
          %240 = dma.done [#allocation8], 3136
        $region48: #{tpu_custom_call.1} parent=39 // pred_fallthru
          _
        %s241 = sand.u32 %s32, 1
        %s242 = scalar_lea.sflag [#allocation5], %s241
        %s243 = sand.u32 %s32, 1
        %s244 = smul.addr %s243, 32
        %s245 = scalar_lea.vmem [#allocation4], %s244
        %p246 = pneg %p45
        %p247 = pneg %p42
        %p248 = pneg %p66
        %p249 = pneg %p63
        %p250 = pneg %p87
        %p251 = pneg %p84
        %p252 = pneg %p108
        %p253 = pneg %p105
        %p254 = pneg %p129
        %p255 = pneg %p126
        %p256 = pneg %p155
        %p257 = pneg %p152
        %s258 = sand.u32 %s142, 1
        %s259 = scalar_lea.sflag [#allocation6], %s258
        %s260 = sand.u32 %s142, 1
        %s261 = smul.addr %s260, 32
        %s262 = scalar_lea.vmem [#allocation9], %s261
        %v263 = vld [vmem:[%s230] sm:$0xff]
        %v264 = vld [vmem:[%s230 + $0x8] sm:$0xff]
        %v265 = vld [vmem:[%s230 + $0x10] sm:$0xff]
        %v266 = vld [vmem:[%s230 + $0x18] sm:$0xff]
        %v267 = vmax.f32 %v263, %v264
        %268 = vmax.xlane.f32.xlu0 %v267
        %v269 = vpop.xlane.xlu0 %268
        %v270 = vmax.f32 %v265, %v266
        %271 = vmax.xlane.f32.xlu0 %v270
        %v272 = vpop.xlane.xlu0 %271
        %v273 = vadd.f32 %v263, %v264
        %274 = vadd.xlane.f32.xlu0 %v273
        %v275 = vpop.xlane.xlu0 %274
        %v276 = vadd.f32 %v265, %v266
        %277 = vadd.xlane.f32.xlu0 %v276
        %v278 = vpop.xlane.xlu0 %277
        %v279 = vmul.f32 %v275, 0.00390625
        %v280 = vmul.f32 %v278, 0.00390625
        %v283 = vlaneseq
        %v284 = vand.u32 %v283, 127
        %v285 = vperm.slane %v269, %v284
        %v286 = vadd.s32 %v284, 4294967288
        %v287 = vperm.slane %v272, %v286
        %vm288 = vcmask 130112
        %v289 = vsel %vm288, %v287, %v285
        %v293 = vperm.slane %v279, %v284
        %v294 = vperm.slane %v280, %v286
        %v295 = vsel %vm288, %v294, %v293
        %vm297 = vcmask 1040384
        %v298 = vsel %vm297, %v289, %v295
        %v299 = vld [vmem:[%s1] sm:$0xff]
        %v300 = vld [vmem:[%s1 + $0x8] sm:$0xff]
        %vm301 = vcmask 130048
        %v303 = vsel %vm301, %v298, 0
        %305 = vmatpush.msra.mxu0 0.0
        %306 = vmatpush.msra.mxu0 0.0
        %307 = vmatpush.msra.mxu0 0.0
        %308 = vmatpush.msra.mxu0 0.0
        %309 = vmatpush.msra.mxu0 0.0
        %310 = vmatpush.msra.mxu0 0.0
        %311 = vmatpush.msra.mxu0 0.0
        %312 = vmatpush.msra.mxu0 0.0
        %313 = vmatpush.msra.mxu0 0.0
        %314 = vmatpush.msra.mxu0 0.0
        %315 = vmatpush.msra.mxu0 0.0
        %316 = vmatpush.msra.mxu0 0.0
        %317 = vmatpush.msra.mxu0 0.0
        %318 = vmatpush.msra.mxu0 0.0
        %319 = vmatpush.msra.mxu0 %v300
        %320 = vmatpush.msra.mxu0 %v299
        %321 = vmatmul.f32.gmra.mxu0 %v303
        %v322 = vpop.f32.mrf.mxu0
        %v323 = vadd.f32 0.0, %v322
        %324 = vdwg.mxu0
        %v325 = vmax.f32 %v323, 0.0
        %v327 = vrot.slane %v325, 1
        %v329 = vadd.f32 %v325, %v327
        %v330 = vld [vmem:[%s2] sm:$0x3]
        %vm331 = vcmask 15360
        %v333 = vsel %vm331, %v329, 0
        %vm335 = vcmask 1041408
        %v337 = vsel %vm335, %v330, 0
        %339 = vmatpush.msra.mxu0 0.0
        %340 = vmatpush.msra.mxu0 0.0
        %341 = vmatpush.msra.mxu0 0.0
        %342 = vmatpush.msra.mxu0 0.0
        %343 = vmatpush.msra.mxu0 0.0
        %344 = vmatpush.msra.mxu0 0.0
        %345 = vmatpush.msra.mxu0 0.0
        %346 = vmatpush.msra.mxu0 0.0
        %347 = vmatpush.msra.mxu0 0.0
        %348 = vmatpush.msra.mxu0 0.0
        %349 = vmatpush.msra.mxu0 0.0
        %350 = vmatpush.msra.mxu0 0.0
        %351 = vmatpush.msra.mxu0 0.0
        %352 = vmatpush.msra.mxu0 0.0
        %353 = vmatpush.msra.mxu0 0.0
        %354 = vmatpush.msra.mxu0 %v337
        %355 = vmatmul.f32.gmra.mxu0 %v333
        %v356 = vpop.f32.mrf.mxu0
        %v357 = vadd.f32 0.0, %v356
        %358 = vdwg.mxu0
        %v359 = vxor.u32 %v357, 2147483648
        %v360 = vmul.f32 %v359, 1.442695
        %v361 = vpow.pop %v360
        %v362 = vadd.f32 %v361, 1.0
        %v363 = vrcp.pop %v362
        %v364 = vmul.f32 %v362, %v363
        %v365 = vsub.f32 1.0, %v364
        %v366 = vmul.f32 %v363, %v365
        %v367 = vadd.f32 %v363, %v366
        %vm368 = vweird.f32 %v362
        %vm369 = vweird.f32 %v363
        %vm370 = vmor %vm368, %vm369
        %v371 = vsel %vm370, %v363, %v367
        %v372 = vand.u32 2147483647, %v362
        %vm373 = vcmp.eq.f32.partialorder %v372, 8.507059e+37
        %v374 = vand.u32 %v362, 2147483648
        %v375 = vor.u32 1.1754944e-38, %v374
        %v376 = vsel %vm373, %v375, %v371
        %v377 = vmul.f32 1.0, %v376
        %v378 = vperm.slane %v377, 0
        %v379 = vlaneseq
        %v380 = vshrl.u32 %v379, 7
        %382 = vset.pattern.permute.xlu0 %v380
        %383 = vperm.xlu0 %382, %v378
        %v384 = vpop.permute.xlu0 %383
        %v385 = vlaneseq
        %v386 = vshrl.u32 %v385, 7
        %v387 = vadd.s32 %v386, 8
        %388 = vset.pattern.permute.xlu0 %v387
        %389 = vperm.xlu0 %388, %v378
        %v390 = vpop.permute.xlu0 %389
        %v391 = vmul.f32 %v263, %v384
        %v392 = vmul.f32 %v264, %v384
        %v393 = vmul.f32 %v265, %v390
        %v394 = vmul.f32 %v266, %v390
        %395 = vst [vmem:[#allocation2] sm:$0xff] %v391
        %396 = vst [vmem:[#allocation2 + $0x8] sm:$0xff] %v392
        %397 = vst [vmem:[#allocation2 + $0x10] sm:$0xff] %v393
        %398 = vst [vmem:[#allocation2 + $0x18] sm:$0xff] %v394
        %v399 = vld [vmem:[#allocation2] sm:$0xff]
        %v400 = vld [vmem:[#allocation2 + $0x8] sm:$0xff]
        %v401 = vld [vmem:[#allocation2 + $0x10] sm:$0xff]
        %v402 = vld [vmem:[#allocation2 + $0x18] sm:$0xff]
        %v403 = vmax.f32 %v399, %v401
        %v404 = vrot.slane %v403, 4
        %v405 = vmax.f32 %v403, %v404
        %v406 = vrot.slane %v405, 2
        %v407 = vmax.f32 %v405, %v406
        %v408 = vrot.slane %v407, 1
        %v409 = vmax.f32 %v407, %v408
        %v410 = vmax.f32 %v400, %v402
        %v411 = vrot.slane %v410, 4
        %v412 = vmax.f32 %v410, %v411
        %v413 = vrot.slane %v412, 2
        %v414 = vmax.f32 %v412, %v413
        %v415 = vrot.slane %v414, 1
        %v416 = vmax.f32 %v414, %v415
        %v417 = vadd.f32 %v399, %v401
        %v418 = vrot.slane %v417, 4
        %v419 = vadd.f32 %v417, %v418
        %v420 = vrot.slane %v419, 2
        %v421 = vadd.f32 %v419, %v420
        %v422 = vrot.slane %v421, 1
        %v423 = vadd.f32 %v421, %v422
        %v424 = vadd.f32 %v400, %v402
        %v425 = vrot.slane %v424, 4
        %v426 = vadd.f32 %v424, %v425
        %v427 = vrot.slane %v426, 2
        %v428 = vadd.f32 %v426, %v427
        %v429 = vrot.slane %v428, 1
        %v430 = vadd.f32 %v428, %v429
        %v431 = vmul.f32 %v423, 0.0625
        %v432 = vmul.f32 %v430, 0.0625
        %v433 = vsel %vm297, %v409, %v431
        %v434 = vsel %vm297, %v416, %v432
        %435 = vrot.lane.b32.xlu0 %v433, 51
        %v436 = vpop.permute.xlu0 %435
        %437 = vrot.lane.b32.xlu0 %v434, 51
        %v438 = vpop.permute.xlu0 %437
        %vm439 = vcmp.lt.s32.totalorder %v284, 51
        %v440 = vsel %vm439, %v436, %v438
        %v441 = vsel %vm439, %v438, %v436
        %v442 = vld [vmem:[#allocation7] sm:$0xf]
        %444 = vst [vmem:[#allocation1] ss:$4 sm:$0xff] %v442
        %v445 = vld.sshfl [vmem:[#allocation1] sm:$0xff pattern:$0x73625140]
        %v446 = vld.sshfl [vmem:[#allocation1 + $0x8] sm:$0xff pattern:$0x73625140]
        %v449 = vmul.f32 %v441, %v445
        %v450 = vmul.f32 %v440, %v446
        %451 = vrot.lane.b32.xlu0 %v433, 50
        %v452 = vpop.permute.xlu0 %451
        %453 = vrot.lane.b32.xlu0 %v434, 50
        %v454 = vpop.permute.xlu0 %453
        %vm455 = vcmp.lt.s32.totalorder %v284, 50
        %v456 = vsel %vm455, %v452, %v454
        %v457 = vsel %vm455, %v454, %v452
        %s458 = scalar_lea.vmem [#allocation7], 4
        %v459 = vld [vmem:[%s458] sm:$0xf]
        %461 = vst [vmem:[#allocation1] ss:$4 sm:$0xff] %v459
        %v462 = vld.sshfl [vmem:[#allocation1] sm:$0xff pattern:$0x73625140]
        %v463 = vld.sshfl [vmem:[#allocation1 + $0x8] sm:$0xff pattern:$0x73625140]
        %v466 = vmul.f32 %v457, %v462
        %v467 = vmul.f32 %v456, %v463
        %v468 = vadd.f32 %v449, %v466
        %v469 = vadd.f32 %v450, %v467
        %470 = vrot.lane.b32.xlu0 %v433, 49
        %v471 = vpop.permute.xlu0 %470
        %472 = vrot.lane.b32.xlu0 %v434, 49
        %v473 = vpop.permute.xlu0 %472
        %vm474 = vcmp.lt.s32.totalorder %v284, 49
        %v475 = vsel %vm474, %v471, %v473
        %v476 = vsel %vm474, %v473, %v471
        %s477 = scalar_lea.vmem [#allocation7], 8
        %v478 = vld [vmem:[%s477] sm:$0xf]
        %480 = vst [vmem:[#allocation1] ss:$4 sm:$0xff] %v478
        %v481 = vld.sshfl [vmem:[#allocation1] sm:$0xff pattern:$0x73625140]
        %v482 = vld.sshfl [vmem:[#allocation1 + $0x8] sm:$0xff pattern:$0x73625140]
        %v485 = vmul.f32 %v476, %v481
        %v486 = vmul.f32 %v475, %v482
        %v487 = vadd.f32 %v468, %v485
        %v488 = vadd.f32 %v469, %v486
        %489 = vrot.lane.b32.xlu0 %v433, 48
        %v490 = vpop.permute.xlu0 %489
        %491 = vrot.lane.b32.xlu0 %v434, 48
        %v492 = vpop.permute.xlu0 %491
        %vm493 = vcmp.lt.s32.totalorder %v284, 48
        %v494 = vsel %vm493, %v490, %v492
        %v495 = vsel %vm493, %v492, %v490
        %s496 = scalar_lea.vmem [#allocation7], 12
        %v497 = vld [vmem:[%s496] sm:$0xf]
        %499 = vst [vmem:[#allocation1] ss:$4 sm:$0xff] %v497
        %v500 = vld.sshfl [vmem:[#allocation1] sm:$0xff pattern:$0x73625140]
        %v501 = vld.sshfl [vmem:[#allocation1 + $0x8] sm:$0xff pattern:$0x73625140]
        %v504 = vmul.f32 %v495, %v500
        %v505 = vmul.f32 %v494, %v501
        %v506 = vadd.f32 %v487, %v504
        %v507 = vadd.f32 %v488, %v505
        %508 = vrot.lane.b32.xlu0 %v433, 47
        %v509 = vpop.permute.xlu0 %508
        %510 = vrot.lane.b32.xlu0 %v434, 47
        %v511 = vpop.permute.xlu0 %510
        %vm512 = vcmp.lt.s32.totalorder %v284, 47
        %v513 = vsel %vm512, %v509, %v511
        %v514 = vsel %vm512, %v511, %v509
        %s515 = scalar_lea.vmem [#allocation7], 16
        %v516 = vld [vmem:[%s515] sm:$0xf]
        %518 = vst [vmem:[#allocation1] ss:$4 sm:$0xff] %v516
        %v519 = vld.sshfl [vmem:[#allocation1] sm:$0xff pattern:$0x73625140]
        %v520 = vld.sshfl [vmem:[#allocation1 + $0x8] sm:$0xff pattern:$0x73625140]
        %v523 = vmul.f32 %v514, %v519
        %v524 = vmul.f32 %v513, %v520
        %v525 = vadd.f32 %v506, %v523
        %v526 = vadd.f32 %v507, %v524
        %527 = vrot.lane.b32.xlu0 %v433, 46
        %v528 = vpop.permute.xlu0 %527
        %529 = vrot.lane.b32.xlu0 %v434, 46
        %v530 = vpop.permute.xlu0 %529
        %vm531 = vcmp.lt.s32.totalorder %v284, 46
        %v532 = vsel %vm531, %v528, %v530
        %v533 = vsel %vm531, %v530, %v528
        %s534 = scalar_lea.vmem [#allocation7], 20
        %v535 = vld [vmem:[%s534] sm:$0xf]
        %537 = vst [vmem:[#allocation1] ss:$4 sm:$0xff] %v535
        %v538 = vld.sshfl [vmem:[#allocation1] sm:$0xff pattern:$0x73625140]
        %v539 = vld.sshfl [vmem:[#allocation1 + $0x8] sm:$0xff pattern:$0x73625140]
        %v542 = vmul.f32 %v533, %v538
        %v543 = vmul.f32 %v532, %v539
        %v544 = vadd.f32 %v525, %v542
        %v545 = vadd.f32 %v526, %v543
        %546 = vrot.lane.b32.xlu0 %v433, 45
        %v547 = vpop.permute.xlu0 %546
        %548 = vrot.lane.b32.xlu0 %v434, 45
        %v549 = vpop.permute.xlu0 %548
        %vm550 = vcmp.lt.s32.totalorder %v284, 45
        %v551 = vsel %vm550, %v547, %v549
        %v552 = vsel %vm550, %v549, %v547
        %s553 = scalar_lea.vmem [#allocation7], 24
        %v554 = vld [vmem:[%s553] sm:$0xf]
        %556 = vst [vmem:[#allocation1] ss:$4 sm:$0xff] %v554
        %v557 = vld.sshfl [vmem:[#allocation1] sm:$0xff pattern:$0x73625140]
        %v558 = vld.sshfl [vmem:[#allocation1 + $0x8] sm:$0xff pattern:$0x73625140]
        %v561 = vmul.f32 %v552, %v557
        %v562 = vmul.f32 %v551, %v558
        %v563 = vadd.f32 %v544, %v561
        %v564 = vadd.f32 %v545, %v562
        %565 = vrot.lane.b32.xlu0 %v433, 35
        %v566 = vpop.permute.xlu0 %565
        %567 = vrot.lane.b32.xlu0 %v434, 35
        %v568 = vpop.permute.xlu0 %567
        %vm569 = vcmp.lt.s32.totalorder %v284, 35
        %v570 = vsel %vm569, %v566, %v568
        %v571 = vsel %vm569, %v568, %v566
        %s572 = scalar_lea.vmem [#allocation7], 28
        %v573 = vld [vmem:[%s572] sm:$0xf]
        %575 = vst [vmem:[#allocation1] ss:$4 sm:$0xff] %v573
        %v576 = vld.sshfl [vmem:[#allocation1] sm:$0xff pattern:$0x73625140]
        %v577 = vld.sshfl [vmem:[#allocation1 + $0x8] sm:$0xff pattern:$0x73625140]
        %v580 = vmul.f32 %v571, %v576
        %v581 = vmul.f32 %v570, %v577
        %v582 = vadd.f32 %v563, %v580
        %v583 = vadd.f32 %v564, %v581
        %584 = vrot.lane.b32.xlu0 %v433, 34
        %v585 = vpop.permute.xlu0 %584
        %586 = vrot.lane.b32.xlu0 %v434, 34
        %v587 = vpop.permute.xlu0 %586
        %vm588 = vcmp.lt.s32.totalorder %v284, 34
        %v589 = vsel %vm588, %v585, %v587
        %v590 = vsel %vm588, %v587, %v585
        %s591 = scalar_lea.vmem [#allocation7], 32
        %v592 = vld [vmem:[%s591] sm:$0xf]
        %594 = vst [vmem:[#allocation1] ss:$4 sm:$0xff] %v592
        %v595 = vld.sshfl [vmem:[#allocation1] sm:$0xff pattern:$0x73625140]
        %v596 = vld.sshfl [vmem:[#allocation1 + $0x8] sm:$0xff pattern:$0x73625140]
        %v599 = vmul.f32 %v590, %v595
        %v600 = vmul.f32 %v589, %v596
        %v601 = vadd.f32 %v582, %v599
        %v602 = vadd.f32 %v583, %v600
        %603 = vrot.lane.b32.xlu0 %v433, 33
        %v604 = vpop.permute.xlu0 %603
        %605 = vrot.lane.b32.xlu0 %v434, 33
        %v606 = vpop.permute.xlu0 %605
        %vm607 = vcmp.lt.s32.totalorder %v284, 33
        %v608 = vsel %vm607, %v604, %v606
        %v609 = vsel %vm607, %v606, %v604
        %s610 = scalar_lea.vmem [#allocation7], 36
        %v611 = vld [vmem:[%s610] sm:$0xf]
        %613 = vst [vmem:[#allocation1] ss:$4 sm:$0xff] %v611
        %v614 = vld.sshfl [vmem:[#allocation1] sm:$0xff pattern:$0x73625140]
        %v615 = vld.sshfl [vmem:[#allocation1 + $0x8] sm:$0xff pattern:$0x73625140]
        %v618 = vmul.f32 %v609, %v614
        %v619 = vmul.f32 %v608, %v615
        %v620 = vadd.f32 %v601, %v618
        %v621 = vadd.f32 %v602, %v619
        %622 = vrot.lane.b32.xlu0 %v433, 32
        %v623 = vpop.permute.xlu0 %622
        %624 = vrot.lane.b32.xlu0 %v434, 32
        %v625 = vpop.permute.xlu0 %624
        %vm626 = vcmp.lt.s32.totalorder %v284, 32
        %v627 = vsel %vm626, %v623, %v625
        %v628 = vsel %vm626, %v625, %v623
        %s629 = scalar_lea.vmem [#allocation7], 40
        %v630 = vld [vmem:[%s629] sm:$0xf]
        %632 = vst [vmem:[#allocation1] ss:$4 sm:$0xff] %v630
        %v633 = vld.sshfl [vmem:[#allocation1] sm:$0xff pattern:$0x73625140]
        %v634 = vld.sshfl [vmem:[#allocation1 + $0x8] sm:$0xff pattern:$0x73625140]
        %v637 = vmul.f32 %v628, %v633
        %v638 = vmul.f32 %v627, %v634
        %v639 = vadd.f32 %v620, %v637
        %v640 = vadd.f32 %v621, %v638
        %641 = vrot.lane.b32.xlu0 %v433, 31
        %v642 = vpop.permute.xlu0 %641
        %643 = vrot.lane.b32.xlu0 %v434, 31
        %v644 = vpop.permute.xlu0 %643
        %vm645 = vcmp.lt.s32.totalorder %v284, 31
        %v646 = vsel %vm645, %v642, %v644
        %v647 = vsel %vm645, %v644, %v642
        %s648 = scalar_lea.vmem [#allocation7], 44
        %v649 = vld [vmem:[%s648] sm:$0xf]
        %651 = vst [vmem:[#allocation1] ss:$4 sm:$0xff] %v649
        %v652 = vld.sshfl [vmem:[#allocation1] sm:$0xff pattern:$0x73625140]
        %v653 = vld.sshfl [vmem:[#allocation1 + $0x8] sm:$0xff pattern:$0x73625140]
        %v656 = vmul.f32 %v647, %v652
        %v657 = vmul.f32 %v646, %v653
        %v658 = vadd.f32 %v639, %v656
        %v659 = vadd.f32 %v640, %v657
        %660 = vrot.lane.b32.xlu0 %v433, 30
        %v661 = vpop.permute.xlu0 %660
        %662 = vrot.lane.b32.xlu0 %v434, 30
        %v663 = vpop.permute.xlu0 %662
        %vm664 = vcmp.lt.s32.totalorder %v284, 30
        %v665 = vsel %vm664, %v661, %v663
        %v666 = vsel %vm664, %v663, %v661
        %s667 = scalar_lea.vmem [#allocation7], 48
        %v668 = vld [vmem:[%s667] sm:$0xf]
        %670 = vst [vmem:[#allocation1] ss:$4 sm:$0xff] %v668
        %v671 = vld.sshfl [vmem:[#allocation1] sm:$0xff pattern:$0x73625140]
        %v672 = vld.sshfl [vmem:[#allocation1 + $0x8] sm:$0xff pattern:$0x73625140]
        %v675 = vmul.f32 %v666, %v671
        %v676 = vmul.f32 %v665, %v672
        %v677 = vadd.f32 %v658, %v675
        %v678 = vadd.f32 %v659, %v676
        %679 = vrot.lane.b32.xlu0 %v433, 29
        %v680 = vpop.permute.xlu0 %679
        %681 = vrot.lane.b32.xlu0 %v434, 29
        %v682 = vpop.permute.xlu0 %681
        %vm683 = vcmp.lt.s32.totalorder %v284, 29
        %v684 = vsel %vm683, %v680, %v682
        %v685 = vsel %vm683, %v682, %v680
        %s686 = scalar_lea.vmem [#allocation7], 52
        %v687 = vld [vmem:[%s686] sm:$0xf]
        %689 = vst [vmem:[#allocation1] ss:$4 sm:$0xff] %v687
        %v690 = vld.sshfl [vmem:[#allocation1] sm:$0xff pattern:$0x73625140]
        %v691 = vld.sshfl [vmem:[#allocation1 + $0x8] sm:$0xff pattern:$0x73625140]
        %v694 = vmul.f32 %v685, %v690
        %v695 = vmul.f32 %v684, %v691
        %v696 = vadd.f32 %v677, %v694
        %v697 = vadd.f32 %v678, %v695
        %698 = vrot.lane.b32.xlu0 %v433, 19
        %v699 = vpop.permute.xlu0 %698
        %700 = vrot.lane.b32.xlu0 %v434, 19
        %v701 = vpop.permute.xlu0 %700
        %vm702 = vcmp.lt.s32.totalorder %v284, 19
        %v703 = vsel %vm702, %v699, %v701
        %v704 = vsel %vm702, %v701, %v699
        %s705 = scalar_lea.vmem [#allocation7], 56
        %v706 = vld [vmem:[%s705] sm:$0xf]
        %708 = vst [vmem:[#allocation1] ss:$4 sm:$0xff] %v706
        %v709 = vld.sshfl [vmem:[#allocation1] sm:$0xff pattern:$0x73625140]
        %v710 = vld.sshfl [vmem:[#allocation1 + $0x8] sm:$0xff pattern:$0x73625140]
        %v713 = vmul.f32 %v704, %v709
        %v714 = vmul.f32 %v703, %v710
        %v715 = vadd.f32 %v696, %v713
        %v716 = vadd.f32 %v697, %v714
        %717 = vrot.lane.b32.xlu0 %v433, 18
        %v718 = vpop.permute.xlu0 %717
        %719 = vrot.lane.b32.xlu0 %v434, 18
        %v720 = vpop.permute.xlu0 %719
        %vm721 = vcmp.lt.s32.totalorder %v284, 18
        %v722 = vsel %vm721, %v718, %v720
        %v723 = vsel %vm721, %v720, %v718
        %s724 = scalar_lea.vmem [#allocation7], 60
        %v725 = vld [vmem:[%s724] sm:$0xf]
        %727 = vst [vmem:[#allocation1] ss:$4 sm:$0xff] %v725
        %v728 = vld.sshfl [vmem:[#allocation1] sm:$0xff pattern:$0x73625140]
        %v729 = vld.sshfl [vmem:[#allocation1 + $0x8] sm:$0xff pattern:$0x73625140]
        %v732 = vmul.f32 %v723, %v728
        %v733 = vmul.f32 %v722, %v729
        %v734 = vadd.f32 %v715, %v732
        %v735 = vadd.f32 %v716, %v733
        %736 = vrot.lane.b32.xlu0 %v433, 17
        %v737 = vpop.permute.xlu0 %736
        %738 = vrot.lane.b32.xlu0 %v434, 17
        %v739 = vpop.permute.xlu0 %738
        %vm740 = vcmp.lt.s32.totalorder %v284, 17
        %v741 = vsel %vm740, %v737, %v739
        %v742 = vsel %vm740, %v739, %v737
        %s743 = scalar_lea.vmem [#allocation7], 64
        %v744 = vld [vmem:[%s743] sm:$0xf]
        %746 = vst [vmem:[#allocation1] ss:$4 sm:$0xff] %v744
        %v747 = vld.sshfl [vmem:[#allocation1] sm:$0xff pattern:$0x73625140]
        %v748 = vld.sshfl [vmem:[#allocation1 + $0x8] sm:$0xff pattern:$0x73625140]
        %v751 = vmul.f32 %v742, %v747
        %v752 = vmul.f32 %v741, %v748
        %v753 = vadd.f32 %v734, %v751
        %v754 = vadd.f32 %v735, %v752
        %755 = vrot.lane.b32.xlu0 %v433, 16
        %v756 = vpop.permute.xlu0 %755
        %757 = vrot.lane.b32.xlu0 %v434, 16
        %v758 = vpop.permute.xlu0 %757
        %vm759 = vcmp.lt.s32.totalorder %v284, 16
        %v760 = vsel %vm759, %v756, %v758
        %v761 = vsel %vm759, %v758, %v756
        %s762 = scalar_lea.vmem [#allocation7], 68
        %v763 = vld [vmem:[%s762] sm:$0xf]
        %765 = vst [vmem:[#allocation1] ss:$4 sm:$0xff] %v763
        %v766 = vld.sshfl [vmem:[#allocation1] sm:$0xff pattern:$0x73625140]
        %v767 = vld.sshfl [vmem:[#allocation1 + $0x8] sm:$0xff pattern:$0x73625140]
        %v770 = vmul.f32 %v761, %v766
        %v771 = vmul.f32 %v760, %v767
        %v772 = vadd.f32 %v753, %v770
        %v773 = vadd.f32 %v754, %v771
        %774 = vrot.lane.b32.xlu0 %v433, 15
        %v775 = vpop.permute.xlu0 %774
        %776 = vrot.lane.b32.xlu0 %v434, 15
        %v777 = vpop.permute.xlu0 %776
        %vm778 = vcmp.lt.s32.totalorder %v284, 15
        %v779 = vsel %vm778, %v775, %v777
        %v780 = vsel %vm778, %v777, %v775
        %s781 = scalar_lea.vmem [#allocation7], 72
        %v782 = vld [vmem:[%s781] sm:$0xf]
        %784 = vst [vmem:[#allocation1] ss:$4 sm:$0xff] %v782
        %v785 = vld.sshfl [vmem:[#allocation1] sm:$0xff pattern:$0x73625140]
        %v786 = vld.sshfl [vmem:[#allocation1 + $0x8] sm:$0xff pattern:$0x73625140]
        %v789 = vmul.f32 %v780, %v785
        %v790 = vmul.f32 %v779, %v786
        %v791 = vadd.f32 %v772, %v789
        %v792 = vadd.f32 %v773, %v790
        %793 = vrot.lane.b32.xlu0 %v433, 14
        %v794 = vpop.permute.xlu0 %793
        %795 = vrot.lane.b32.xlu0 %v434, 14
        %v796 = vpop.permute.xlu0 %795
        %vm797 = vcmp.lt.s32.totalorder %v284, 14
        %v798 = vsel %vm797, %v794, %v796
        %v799 = vsel %vm797, %v796, %v794
        %s800 = scalar_lea.vmem [#allocation7], 76
        %v801 = vld [vmem:[%s800] sm:$0xf]
        %803 = vst [vmem:[#allocation1] ss:$4 sm:$0xff] %v801
        %v804 = vld.sshfl [vmem:[#allocation1] sm:$0xff pattern:$0x73625140]
        %v805 = vld.sshfl [vmem:[#allocation1 + $0x8] sm:$0xff pattern:$0x73625140]
        %v808 = vmul.f32 %v799, %v804
        %v809 = vmul.f32 %v798, %v805
        %v810 = vadd.f32 %v791, %v808
        %v811 = vadd.f32 %v792, %v809
        %812 = vrot.lane.b32.xlu0 %v433, 13
        %v813 = vpop.permute.xlu0 %812
        %814 = vrot.lane.b32.xlu0 %v434, 13
        %v815 = vpop.permute.xlu0 %814
        %vm816 = vcmp.lt.s32.totalorder %v284, 13
        %v817 = vsel %vm816, %v813, %v815
        %v818 = vsel %vm816, %v815, %v813
        %s819 = scalar_lea.vmem [#allocation7], 80
        %v820 = vld [vmem:[%s819] sm:$0xf]
        %822 = vst [vmem:[#allocation1] ss:$4 sm:$0xff] %v820
        %v823 = vld.sshfl [vmem:[#allocation1] sm:$0xff pattern:$0x73625140]
        %v824 = vld.sshfl [vmem:[#allocation1 + $0x8] sm:$0xff pattern:$0x73625140]
        %v827 = vmul.f32 %v818, %v823
        %v828 = vmul.f32 %v817, %v824
        %v829 = vadd.f32 %v810, %v827
        %v830 = vadd.f32 %v811, %v828
        %831 = vrot.lane.b32.xlu0 %v433, 3
        %v832 = vpop.permute.xlu0 %831
        %833 = vrot.lane.b32.xlu0 %v434, 3
        %v834 = vpop.permute.xlu0 %833
        %vm835 = vcmp.lt.s32.totalorder %v284, 3
        %v836 = vsel %vm835, %v832, %v834
        %v837 = vsel %vm835, %v834, %v832
        %s838 = scalar_lea.vmem [#allocation7], 84
        %v839 = vld [vmem:[%s838] sm:$0xf]
        %841 = vst [vmem:[#allocation1] ss:$4 sm:$0xff] %v839
        %v842 = vld.sshfl [vmem:[#allocation1] sm:$0xff pattern:$0x73625140]
        %v843 = vld.sshfl [vmem:[#allocation1 + $0x8] sm:$0xff pattern:$0x73625140]
        %v846 = vmul.f32 %v837, %v842
        %v847 = vmul.f32 %v836, %v843
        %v848 = vadd.f32 %v829, %v846
        %v849 = vadd.f32 %v830, %v847
        %850 = vrot.lane.b32.xlu0 %v433, 2
        %v851 = vpop.permute.xlu0 %850
        %852 = vrot.lane.b32.xlu0 %v434, 2
        %v853 = vpop.permute.xlu0 %852
        %vm854 = vcmp.lt.s32.totalorder %v284, 2
        %v855 = vsel %vm854, %v851, %v853
        %v856 = vsel %vm854, %v853, %v851
        %s857 = scalar_lea.vmem [#allocation7], 88
        %v858 = vld [vmem:[%s857] sm:$0xf]
        %860 = vst [vmem:[#allocation1] ss:$4 sm:$0xff] %v858
        %v861 = vld.sshfl [vmem:[#allocation1] sm:$0xff pattern:$0x73625140]
        %v862 = vld.sshfl [vmem:[#allocation1 + $0x8] sm:$0xff pattern:$0x73625140]
        %v865 = vmul.f32 %v856, %v861
        %v866 = vmul.f32 %v855, %v862
        %v867 = vadd.f32 %v848, %v865
        %v868 = vadd.f32 %v849, %v866
        %869 = vrot.lane.b32.xlu0 %v433, 1
        %v870 = vpop.permute.xlu0 %869
        %871 = vrot.lane.b32.xlu0 %v434, 1
        %v872 = vpop.permute.xlu0 %871
        %vm873 = vcmp.lt.s32.totalorder %v284, 1
        %v874 = vsel %vm873, %v870, %v872
        %v875 = vsel %vm873, %v872, %v870
        %s876 = scalar_lea.vmem [#allocation7], 92
        %v877 = vld [vmem:[%s876] sm:$0xf]
        %879 = vst [vmem:[#allocation1] ss:$4 sm:$0xff] %v877
        %v880 = vld.sshfl [vmem:[#allocation1] sm:$0xff pattern:$0x73625140]
        %v881 = vld.sshfl [vmem:[#allocation1 + $0x8] sm:$0xff pattern:$0x73625140]
        %v884 = vmul.f32 %v875, %v880
        %v885 = vmul.f32 %v874, %v881
        %v886 = vadd.f32 %v867, %v884
        %v887 = vadd.f32 %v868, %v885
        %s888 = scalar_lea.vmem [#allocation7], 96
        %v889 = vld [vmem:[%s888] sm:$0xf]
        %891 = vst [vmem:[#allocation1] ss:$4 sm:$0xff] %v889
        %v892 = vld.sshfl [vmem:[#allocation1] sm:$0xff pattern:$0x73625140]
        %v893 = vld.sshfl [vmem:[#allocation1 + $0x8] sm:$0xff pattern:$0x73625140]
        %v896 = vmul.f32 %v433, %v892
        %v897 = vmul.f32 %v434, %v893
        %v898 = vadd.f32 %v886, %v896
        %v899 = vadd.f32 %v887, %v897
        %900 = vrot.lane.b32.xlu0 %v433, 127
        %v901 = vpop.permute.xlu0 %900
        %902 = vrot.lane.b32.xlu0 %v434, 127
        %v903 = vpop.permute.xlu0 %902
        %vm904 = vcmp.lt.s32.totalorder %v284, 127
        %v905 = vsel %vm904, %v901, %v903
        %v906 = vsel %vm904, %v903, %v901
        %s907 = scalar_lea.vmem [#allocation7], 100
        %v908 = vld [vmem:[%s907] sm:$0xf]
        %910 = vst [vmem:[#allocation1] ss:$4 sm:$0xff] %v908
        %v911 = vld.sshfl [vmem:[#allocation1] sm:$0xff pattern:$0x73625140]
        %v912 = vld.sshfl [vmem:[#allocation1 + $0x8] sm:$0xff pattern:$0x73625140]
        %v915 = vmul.f32 %v905, %v911
        %v916 = vmul.f32 %v906, %v912
        %v917 = vadd.f32 %v898, %v915
        %v918 = vadd.f32 %v899, %v916
        %919 = vrot.lane.b32.xlu0 %v433, 126
        %v920 = vpop.permute.xlu0 %919
        %921 = vrot.lane.b32.xlu0 %v434, 126
        %v922 = vpop.permute.xlu0 %921
        %vm923 = vcmp.lt.s32.totalorder %v284, 126
        %v924 = vsel %vm923, %v920, %v922
        %v925 = vsel %vm923, %v922, %v920
        %s926 = scalar_lea.vmem [#allocation7], 104
        %v927 = vld [vmem:[%s926] sm:$0xf]
        %929 = vst [vmem:[#allocation1] ss:$4 sm:$0xff] %v927
        %v930 = vld.sshfl [vmem:[#allocation1] sm:$0xff pattern:$0x73625140]
        %v931 = vld.sshfl [vmem:[#allocation1 + $0x8] sm:$0xff pattern:$0x73625140]
        %v934 = vmul.f32 %v924, %v930
        %v935 = vmul.f32 %v925, %v931
        %v936 = vadd.f32 %v917, %v934
        %v937 = vadd.f32 %v918, %v935
        %938 = vrot.lane.b32.xlu0 %v433, 125
        %v939 = vpop.permute.xlu0 %938
        %940 = vrot.lane.b32.xlu0 %v434, 125
        %v941 = vpop.permute.xlu0 %940
        %vm942 = vcmp.lt.s32.totalorder %v284, 125
        %v943 = vsel %vm942, %v939, %v941
        %v944 = vsel %vm942, %v941, %v939
        %s945 = scalar_lea.vmem [#allocation7], 108
        %v946 = vld [vmem:[%s945] sm:$0xf]
        %948 = vst [vmem:[#allocation1] ss:$4 sm:$0xff] %v946
        %v949 = vld.sshfl [vmem:[#allocation1] sm:$0xff pattern:$0x73625140]
        %v950 = vld.sshfl [vmem:[#allocation1 + $0x8] sm:$0xff pattern:$0x73625140]
        %v953 = vmul.f32 %v943, %v949
        %v954 = vmul.f32 %v944, %v950
        %v955 = vadd.f32 %v936, %v953
        %v956 = vadd.f32 %v937, %v954
        %957 = vrot.lane.b32.xlu0 %v433, 115
        %v958 = vpop.permute.xlu0 %957
        %959 = vrot.lane.b32.xlu0 %v434, 115
        %v960 = vpop.permute.xlu0 %959
        %vm961 = vcmp.lt.s32.totalorder %v284, 115
        %v962 = vsel %vm961, %v958, %v960
        %v963 = vsel %vm961, %v960, %v958
        %s964 = scalar_lea.vmem [#allocation7], 112
        %v965 = vld [vmem:[%s964] sm:$0xf]
        %967 = vst [vmem:[#allocation1] ss:$4 sm:$0xff] %v965
        %v968 = vld.sshfl [vmem:[#allocation1] sm:$0xff pattern:$0x73625140]
        %v969 = vld.sshfl [vmem:[#allocation1 + $0x8] sm:$0xff pattern:$0x73625140]
        %v972 = vmul.f32 %v962, %v968
        %v973 = vmul.f32 %v963, %v969
        %v974 = vadd.f32 %v955, %v972
        %v975 = vadd.f32 %v956, %v973
        %976 = vrot.lane.b32.xlu0 %v433, 114
        %v977 = vpop.permute.xlu0 %976
        %978 = vrot.lane.b32.xlu0 %v434, 114
        %v979 = vpop.permute.xlu0 %978
        %vm980 = vcmp.lt.s32.totalorder %v284, 114
        %v981 = vsel %vm980, %v977, %v979
        %v982 = vsel %vm980, %v979, %v977
        %s983 = scalar_lea.vmem [#allocation7], 116
        %v984 = vld [vmem:[%s983] sm:$0xf]
        %986 = vst [vmem:[#allocation1] ss:$4 sm:$0xff] %v984
        %v987 = vld.sshfl [vmem:[#allocation1] sm:$0xff pattern:$0x73625140]
        %v988 = vld.sshfl [vmem:[#allocation1 + $0x8] sm:$0xff pattern:$0x73625140]
        %v991 = vmul.f32 %v981, %v987
        %v992 = vmul.f32 %v982, %v988
        %v993 = vadd.f32 %v974, %v991
        %v994 = vadd.f32 %v975, %v992
        %995 = vrot.lane.b32.xlu0 %v433, 113
        %v996 = vpop.permute.xlu0 %995
        %997 = vrot.lane.b32.xlu0 %v434, 113
        %v998 = vpop.permute.xlu0 %997
        %vm999 = vcmp.lt.s32.totalorder %v284, 113
        %v1000 = vsel %vm999, %v996, %v998
        %v1001 = vsel %vm999, %v998, %v996
        %s1002 = scalar_lea.vmem [#allocation7], 120
        %v1003 = vld [vmem:[%s1002] sm:$0xf]
        %1005 = vst [vmem:[#allocation1] ss:$4 sm:$0xff] %v1003
        %v1006 = vld.sshfl [vmem:[#allocation1] sm:$0xff pattern:$0x73625140]
        %v1007 = vld.sshfl [vmem:[#allocation1 + $0x8] sm:$0xff pattern:$0x73625140]
        %v1010 = vmul.f32 %v1000, %v1006
        %v1011 = vmul.f32 %v1001, %v1007
        %v1012 = vadd.f32 %v993, %v1010
        %v1013 = vadd.f32 %v994, %v1011
        %1014 = vrot.lane.b32.xlu0 %v433, 112
        %v1015 = vpop.permute.xlu0 %1014
        %1016 = vrot.lane.b32.xlu0 %v434, 112
        %v1017 = vpop.permute.xlu0 %1016
        %vm1018 = vcmp.lt.s32.totalorder %v284, 112
        %v1019 = vsel %vm1018, %v1015, %v1017
        %v1020 = vsel %vm1018, %v1017, %v1015
        %s1021 = scalar_lea.vmem [#allocation7], 124
        %v1022 = vld [vmem:[%s1021] sm:$0xf]
        %1024 = vst [vmem:[#allocation1] ss:$4 sm:$0xff] %v1022
        %v1025 = vld.sshfl [vmem:[#allocation1] sm:$0xff pattern:$0x73625140]
        %v1026 = vld.sshfl [vmem:[#allocation1 + $0x8] sm:$0xff pattern:$0x73625140]
        %v1029 = vmul.f32 %v1019, %v1025
        %v1030 = vmul.f32 %v1020, %v1026
        %v1031 = vadd.f32 %v1012, %v1029
        %v1032 = vadd.f32 %v1013, %v1030
        %1033 = vrot.lane.b32.xlu0 %v433, 111
        %v1034 = vpop.permute.xlu0 %1033
        %1035 = vrot.lane.b32.xlu0 %v434, 111
        %v1036 = vpop.permute.xlu0 %1035
        %vm1037 = vcmp.lt.s32.totalorder %v284, 111
        %v1038 = vsel %vm1037, %v1034, %v1036
        %v1039 = vsel %vm1037, %v1036, %v1034
        %s1040 = scalar_lea.vmem [#allocation7], 128
        %v1041 = vld [vmem:[%s1040] sm:$0xf]
        %1043 = vst [vmem:[#allocation1] ss:$4 sm:$0xff] %v1041
        %v1044 = vld.sshfl [vmem:[#allocation1] sm:$0xff pattern:$0x73625140]
        %v1045 = vld.sshfl [vmem:[#allocation1 + $0x8] sm:$0xff pattern:$0x73625140]
        %v1048 = vmul.f32 %v1038, %v1044
        %v1049 = vmul.f32 %v1039, %v1045
        %v1050 = vadd.f32 %v1031, %v1048
        %v1051 = vadd.f32 %v1032, %v1049
        %1052 = vrot.lane.b32.xlu0 %v433, 110
        %v1053 = vpop.permute.xlu0 %1052
        %1054 = vrot.lane.b32.xlu0 %v434, 110
        %v1055 = vpop.permute.xlu0 %1054
        %vm1056 = vcmp.lt.s32.totalorder %v284, 110
        %v1057 = vsel %vm1056, %v1053, %v1055
        %v1058 = vsel %vm1056, %v1055, %v1053
        %s1059 = scalar_lea.vmem [#allocation7], 132
        %v1060 = vld [vmem:[%s1059] sm:$0xf]
        %1062 = vst [vmem:[#allocation1] ss:$4 sm:$0xff] %v1060
        %v1063 = vld.sshfl [vmem:[#allocation1] sm:$0xff pattern:$0x73625140]
        %v1064 = vld.sshfl [vmem:[#allocation1 + $0x8] sm:$0xff pattern:$0x73625140]
        %v1067 = vmul.f32 %v1057, %v1063
        %v1068 = vmul.f32 %v1058, %v1064
        %v1069 = vadd.f32 %v1050, %v1067
        %v1070 = vadd.f32 %v1051, %v1068
        %1071 = vrot.lane.b32.xlu0 %v433, 109
        %v1072 = vpop.permute.xlu0 %1071
        %1073 = vrot.lane.b32.xlu0 %v434, 109
        %v1074 = vpop.permute.xlu0 %1073
        %vm1075 = vcmp.lt.s32.totalorder %v284, 109
        %v1076 = vsel %vm1075, %v1072, %v1074
        %v1077 = vsel %vm1075, %v1074, %v1072
        %s1078 = scalar_lea.vmem [#allocation7], 136
        %v1079 = vld [vmem:[%s1078] sm:$0xf]
        %1081 = vst [vmem:[#allocation1] ss:$4 sm:$0xff] %v1079
        %v1082 = vld.sshfl [vmem:[#allocation1] sm:$0xff pattern:$0x73625140]
        %v1083 = vld.sshfl [vmem:[#allocation1 + $0x8] sm:$0xff pattern:$0x73625140]
        %v1086 = vmul.f32 %v1076, %v1082
        %v1087 = vmul.f32 %v1077, %v1083
        %v1088 = vadd.f32 %v1069, %v1086
        %v1089 = vadd.f32 %v1070, %v1087
        %1090 = vrot.lane.b32.xlu0 %v433, 99
        %v1091 = vpop.permute.xlu0 %1090
        %1092 = vrot.lane.b32.xlu0 %v434, 99
        %v1093 = vpop.permute.xlu0 %1092
        %vm1094 = vcmp.lt.s32.totalorder %v284, 99
        %v1095 = vsel %vm1094, %v1091, %v1093
        %v1096 = vsel %vm1094, %v1093, %v1091
        %s1097 = scalar_lea.vmem [#allocation7], 140
        %v1098 = vld [vmem:[%s1097] sm:$0xf]
        %1100 = vst [vmem:[#allocation1] ss:$4 sm:$0xff] %v1098
        %v1101 = vld.sshfl [vmem:[#allocation1] sm:$0xff pattern:$0x73625140]
        %v1102 = vld.sshfl [vmem:[#allocation1 + $0x8] sm:$0xff pattern:$0x73625140]
        %v1105 = vmul.f32 %v1095, %v1101
        %v1106 = vmul.f32 %v1096, %v1102
        %v1107 = vadd.f32 %v1088, %v1105
        %v1108 = vadd.f32 %v1089, %v1106
        %1109 = vrot.lane.b32.xlu0 %v433, 98
        %v1110 = vpop.permute.xlu0 %1109
        %1111 = vrot.lane.b32.xlu0 %v434, 98
        %v1112 = vpop.permute.xlu0 %1111
        %vm1113 = vcmp.lt.s32.totalorder %v284, 98
        %v1114 = vsel %vm1113, %v1110, %v1112
        %v1115 = vsel %vm1113, %v1112, %v1110
        %s1116 = scalar_lea.vmem [#allocation7], 144
        %v1117 = vld [vmem:[%s1116] sm:$0xf]
        %1119 = vst [vmem:[#allocation1] ss:$4 sm:$0xff] %v1117
        %v1120 = vld.sshfl [vmem:[#allocation1] sm:$0xff pattern:$0x73625140]
        %v1121 = vld.sshfl [vmem:[#allocation1 + $0x8] sm:$0xff pattern:$0x73625140]
        %v1124 = vmul.f32 %v1114, %v1120
        %v1125 = vmul.f32 %v1115, %v1121
        %v1126 = vadd.f32 %v1107, %v1124
        %v1127 = vadd.f32 %v1108, %v1125
        %1128 = vrot.lane.b32.xlu0 %v433, 97
        %v1129 = vpop.permute.xlu0 %1128
        %1130 = vrot.lane.b32.xlu0 %v434, 97
        %v1131 = vpop.permute.xlu0 %1130
        %vm1132 = vcmp.lt.s32.totalorder %v284, 97
        %v1133 = vsel %vm1132, %v1129, %v1131
        %v1134 = vsel %vm1132, %v1131, %v1129
        %s1135 = scalar_lea.vmem [#allocation7], 148
        %v1136 = vld [vmem:[%s1135] sm:$0xf]
        %1138 = vst [vmem:[#allocation1] ss:$4 sm:$0xff] %v1136
        %v1139 = vld.sshfl [vmem:[#allocation1] sm:$0xff pattern:$0x73625140]
        %v1140 = vld.sshfl [vmem:[#allocation1 + $0x8] sm:$0xff pattern:$0x73625140]
        %v1143 = vmul.f32 %v1133, %v1139
        %v1144 = vmul.f32 %v1134, %v1140
        %v1145 = vadd.f32 %v1126, %v1143
        %v1146 = vadd.f32 %v1127, %v1144
        %1147 = vrot.lane.b32.xlu0 %v433, 96
        %v1148 = vpop.permute.xlu0 %1147
        %1149 = vrot.lane.b32.xlu0 %v434, 96
        %v1150 = vpop.permute.xlu0 %1149
        %vm1151 = vcmp.lt.s32.totalorder %v284, 96
        %v1152 = vsel %vm1151, %v1148, %v1150
        %v1153 = vsel %vm1151, %v1150, %v1148
        %s1154 = scalar_lea.vmem [#allocation7], 152
        %v1155 = vld [vmem:[%s1154] sm:$0xf]
        %1157 = vst [vmem:[#allocation1] ss:$4 sm:$0xff] %v1155
        %v1158 = vld.sshfl [vmem:[#allocation1] sm:$0xff pattern:$0x73625140]
        %v1159 = vld.sshfl [vmem:[#allocation1 + $0x8] sm:$0xff pattern:$0x73625140]
        %v1162 = vmul.f32 %v1152, %v1158
        %v1163 = vmul.f32 %v1153, %v1159
        %v1164 = vadd.f32 %v1145, %v1162
        %v1165 = vadd.f32 %v1146, %v1163
        %1166 = vrot.lane.b32.xlu0 %v433, 95
        %v1167 = vpop.permute.xlu0 %1166
        %1168 = vrot.lane.b32.xlu0 %v434, 95
        %v1169 = vpop.permute.xlu0 %1168
        %vm1170 = vcmp.lt.s32.totalorder %v284, 95
        %v1171 = vsel %vm1170, %v1167, %v1169
        %v1172 = vsel %vm1170, %v1169, %v1167
        %s1173 = scalar_lea.vmem [#allocation7], 156
        %v1174 = vld [vmem:[%s1173] sm:$0xf]
        %1176 = vst [vmem:[#allocation1] ss:$4 sm:$0xff] %v1174
        %v1177 = vld.sshfl [vmem:[#allocation1] sm:$0xff pattern:$0x73625140]
        %v1178 = vld.sshfl [vmem:[#allocation1 + $0x8] sm:$0xff pattern:$0x73625140]
        %v1181 = vmul.f32 %v1171, %v1177
        %v1182 = vmul.f32 %v1172, %v1178
        %v1183 = vadd.f32 %v1164, %v1181
        %v1184 = vadd.f32 %v1165, %v1182
        %1185 = vrot.lane.b32.xlu0 %v433, 94
        %v1186 = vpop.permute.xlu0 %1185
        %1187 = vrot.lane.b32.xlu0 %v434, 94
        %v1188 = vpop.permute.xlu0 %1187
        %vm1189 = vcmp.lt.s32.totalorder %v284, 94
        %v1190 = vsel %vm1189, %v1186, %v1188
        %v1191 = vsel %vm1189, %v1188, %v1186
        %s1192 = scalar_lea.vmem [#allocation7], 160
        %v1193 = vld [vmem:[%s1192] sm:$0xf]
        %1195 = vst [vmem:[#allocation1] ss:$4 sm:$0xff] %v1193
        %v1196 = vld.sshfl [vmem:[#allocation1] sm:$0xff pattern:$0x73625140]
        %v1197 = vld.sshfl [vmem:[#allocation1 + $0x8] sm:$0xff pattern:$0x73625140]
        %v1200 = vmul.f32 %v1190, %v1196
        %v1201 = vmul.f32 %v1191, %v1197
        %v1202 = vadd.f32 %v1183, %v1200
        %v1203 = vadd.f32 %v1184, %v1201
        %1204 = vrot.lane.b32.xlu0 %v433, 93
        %v1205 = vpop.permute.xlu0 %1204
        %1206 = vrot.lane.b32.xlu0 %v434, 93
        %v1207 = vpop.permute.xlu0 %1206
        %vm1208 = vcmp.lt.s32.totalorder %v284, 93
        %v1209 = vsel %vm1208, %v1205, %v1207
        %v1210 = vsel %vm1208, %v1207, %v1205
        %s1211 = scalar_lea.vmem [#allocation7], 164
        %v1212 = vld [vmem:[%s1211] sm:$0xf]
        %1214 = vst [vmem:[#allocation1] ss:$4 sm:$0xff] %v1212
        %v1215 = vld.sshfl [vmem:[#allocation1] sm:$0xff pattern:$0x73625140]
        %v1216 = vld.sshfl [vmem:[#allocation1 + $0x8] sm:$0xff pattern:$0x73625140]
        %v1219 = vmul.f32 %v1209, %v1215
        %v1220 = vmul.f32 %v1210, %v1216
        %v1221 = vadd.f32 %v1202, %v1219
        %v1222 = vadd.f32 %v1203, %v1220
        %1223 = vrot.lane.b32.xlu0 %v433, 83
        %v1224 = vpop.permute.xlu0 %1223
        %1225 = vrot.lane.b32.xlu0 %v434, 83
        %v1226 = vpop.permute.xlu0 %1225
        %vm1227 = vcmp.lt.s32.totalorder %v284, 83
        %v1228 = vsel %vm1227, %v1224, %v1226
        %v1229 = vsel %vm1227, %v1226, %v1224
        %s1230 = scalar_lea.vmem [#allocation7], 168
        %v1231 = vld [vmem:[%s1230] sm:$0xf]
        %1233 = vst [vmem:[#allocation1] ss:$4 sm:$0xff] %v1231
        %v1234 = vld.sshfl [vmem:[#allocation1] sm:$0xff pattern:$0x73625140]
        %v1235 = vld.sshfl [vmem:[#allocation1 + $0x8] sm:$0xff pattern:$0x73625140]
        %v1238 = vmul.f32 %v1228, %v1234
        %v1239 = vmul.f32 %v1229, %v1235
        %v1240 = vadd.f32 %v1221, %v1238
        %v1241 = vadd.f32 %v1222, %v1239
        %1242 = vrot.lane.b32.xlu0 %v433, 82
        %v1243 = vpop.permute.xlu0 %1242
        %1244 = vrot.lane.b32.xlu0 %v434, 82
        %v1245 = vpop.permute.xlu0 %1244
        %vm1246 = vcmp.lt.s32.totalorder %v284, 82
        %v1247 = vsel %vm1246, %v1243, %v1245
        %v1248 = vsel %vm1246, %v1245, %v1243
        %s1249 = scalar_lea.vmem [#allocation7], 172
        %v1250 = vld [vmem:[%s1249] sm:$0xf]
        %1252 = vst [vmem:[#allocation1] ss:$4 sm:$0xff] %v1250
        %v1253 = vld.sshfl [vmem:[#allocation1] sm:$0xff pattern:$0x73625140]
        %v1254 = vld.sshfl [vmem:[#allocation1 + $0x8] sm:$0xff pattern:$0x73625140]
        %v1257 = vmul.f32 %v1247, %v1253
        %v1258 = vmul.f32 %v1248, %v1254
        %v1259 = vadd.f32 %v1240, %v1257
        %v1260 = vadd.f32 %v1241, %v1258
        %1261 = vrot.lane.b32.xlu0 %v433, 81
        %v1262 = vpop.permute.xlu0 %1261
        %1263 = vrot.lane.b32.xlu0 %v434, 81
        %v1264 = vpop.permute.xlu0 %1263
        %vm1265 = vcmp.lt.s32.totalorder %v284, 81
        %v1266 = vsel %vm1265, %v1262, %v1264
        %v1267 = vsel %vm1265, %v1264, %v1262
        %s1268 = scalar_lea.vmem [#allocation7], 176
        %v1269 = vld [vmem:[%s1268] sm:$0xf]
        %1271 = vst [vmem:[#allocation1] ss:$4 sm:$0xff] %v1269
        %v1272 = vld.sshfl [vmem:[#allocation1] sm:$0xff pattern:$0x73625140]
        %v1273 = vld.sshfl [vmem:[#allocation1 + $0x8] sm:$0xff pattern:$0x73625140]
        %v1276 = vmul.f32 %v1266, %v1272
        %v1277 = vmul.f32 %v1267, %v1273
        %v1278 = vadd.f32 %v1259, %v1276
        %v1279 = vadd.f32 %v1260, %v1277
        %1280 = vrot.lane.b32.xlu0 %v433, 80
        %v1281 = vpop.permute.xlu0 %1280
        %1282 = vrot.lane.b32.xlu0 %v434, 80
        %v1283 = vpop.permute.xlu0 %1282
        %vm1284 = vcmp.lt.s32.totalorder %v284, 80
        %v1285 = vsel %vm1284, %v1281, %v1283
        %v1286 = vsel %vm1284, %v1283, %v1281
        %s1287 = scalar_lea.vmem [#allocation7], 180
        %v1288 = vld [vmem:[%s1287] sm:$0xf]
        %1290 = vst [vmem:[#allocation1] ss:$4 sm:$0xff] %v1288
        %v1291 = vld.sshfl [vmem:[#allocation1] sm:$0xff pattern:$0x73625140]
        %v1292 = vld.sshfl [vmem:[#allocation1 + $0x8] sm:$0xff pattern:$0x73625140]
        %v1295 = vmul.f32 %v1285, %v1291
        %v1296 = vmul.f32 %v1286, %v1292
        %v1297 = vadd.f32 %v1278, %v1295
        %v1298 = vadd.f32 %v1279, %v1296
        %1299 = vrot.lane.b32.xlu0 %v433, 79
        %v1300 = vpop.permute.xlu0 %1299
        %1301 = vrot.lane.b32.xlu0 %v434, 79
        %v1302 = vpop.permute.xlu0 %1301
        %vm1303 = vcmp.lt.s32.totalorder %v284, 79
        %v1304 = vsel %vm1303, %v1300, %v1302
        %v1305 = vsel %vm1303, %v1302, %v1300
        %s1306 = scalar_lea.vmem [#allocation7], 184
        %v1307 = vld [vmem:[%s1306] sm:$0xf]
        %1309 = vst [vmem:[#allocation1] ss:$4 sm:$0xff] %v1307
        %v1310 = vld.sshfl [vmem:[#allocation1] sm:$0xff pattern:$0x73625140]
        %v1311 = vld.sshfl [vmem:[#allocation1 + $0x8] sm:$0xff pattern:$0x73625140]
        %v1314 = vmul.f32 %v1304, %v1310
        %v1315 = vmul.f32 %v1305, %v1311
        %v1316 = vadd.f32 %v1297, %v1314
        %v1317 = vadd.f32 %v1298, %v1315
        %1318 = vrot.lane.b32.xlu0 %v433, 78
        %v1319 = vpop.permute.xlu0 %1318
        %1320 = vrot.lane.b32.xlu0 %v434, 78
        %v1321 = vpop.permute.xlu0 %1320
        %vm1322 = vcmp.lt.s32.totalorder %v284, 78
        %v1323 = vsel %vm1322, %v1319, %v1321
        %v1324 = vsel %vm1322, %v1321, %v1319
        %s1325 = scalar_lea.vmem [#allocation7], 188
        %v1326 = vld [vmem:[%s1325] sm:$0xf]
        %1328 = vst [vmem:[#allocation1] ss:$4 sm:$0xff] %v1326
        %v1329 = vld.sshfl [vmem:[#allocation1] sm:$0xff pattern:$0x73625140]
        %v1330 = vld.sshfl [vmem:[#allocation1 + $0x8] sm:$0xff pattern:$0x73625140]
        %v1333 = vmul.f32 %v1323, %v1329
        %v1334 = vmul.f32 %v1324, %v1330
        %v1335 = vadd.f32 %v1316, %v1333
        %v1336 = vadd.f32 %v1317, %v1334
        %1337 = vrot.lane.b32.xlu0 %v433, 77
        %v1338 = vpop.permute.xlu0 %1337
        %1339 = vrot.lane.b32.xlu0 %v434, 77
        %v1340 = vpop.permute.xlu0 %1339
        %vm1341 = vcmp.lt.s32.totalorder %v284, 77
        %v1342 = vsel %vm1341, %v1338, %v1340
        %v1343 = vsel %vm1341, %v1340, %v1338
        %s1344 = scalar_lea.vmem [#allocation7], 192
        %v1345 = vld [vmem:[%s1344] sm:$0xf]
        %1347 = vst [vmem:[#allocation1] ss:$4 sm:$0xff] %v1345
        %v1348 = vld.sshfl [vmem:[#allocation1] sm:$0xff pattern:$0x73625140]
        %v1349 = vld.sshfl [vmem:[#allocation1 + $0x8] sm:$0xff pattern:$0x73625140]
        %v1352 = vmul.f32 %v1342, %v1348
        %v1353 = vmul.f32 %v1343, %v1349
        %v1354 = vadd.f32 %v1335, %v1352
        %v1355 = vadd.f32 %v1336, %v1353
        %v1358 = vrot.slane %v1354, 1
        %v1359 = vrot.slane %v1355, 1
        %v1362 = vadd.f32 %v1354, %v1358
        %v1363 = vadd.f32 %v1355, %v1359
        %s1364 = sld [smem:[#allocation3]]
        %v1365 = vstv %s1364
        %v1366 = vadd.f32 %v1362, %v1365
        %v1367 = vadd.f32 %v1363, %v1365
        %v1368 = vxor.u32 %v1366, 2147483648
        %v1369 = vxor.u32 %v1367, 2147483648
        %v1370 = vmul.f32 %v1368, 1.442695
        %v1371 = vpow.pop %v1370
        %v1372 = vmul.f32 %v1369, 1.442695
        %v1373 = vpow.pop %v1372
        %v1374 = vadd.f32 %v1371, 1.0
        %v1375 = vadd.f32 %v1373, 1.0
        %v1376 = vrcp.pop %v1374
        %v1377 = vmul.f32 %v1374, %v1376
        %v1378 = vsub.f32 1.0, %v1377
        %v1379 = vmul.f32 %v1376, %v1378
        %v1380 = vadd.f32 %v1376, %v1379
        %vm1381 = vweird.f32 %v1374
        %vm1382 = vweird.f32 %v1376
        %vm1383 = vmor %vm1381, %vm1382
        %v1384 = vsel %vm1383, %v1376, %v1380
        %v1385 = vand.u32 2147483647, %v1374
        %vm1386 = vcmp.eq.f32.partialorder %v1385, 8.507059e+37
        %v1387 = vand.u32 %v1374, 2147483648
        %v1388 = vor.u32 1.1754944e-38, %v1387
        %v1389 = vsel %vm1386, %v1388, %v1384
        %v1390 = vmul.f32 1.0, %v1389
        %v1391 = vrcp.pop %v1375
        %v1392 = vmul.f32 %v1375, %v1391
        %v1393 = vsub.f32 1.0, %v1392
        %v1394 = vmul.f32 %v1391, %v1393
        %v1395 = vadd.f32 %v1391, %v1394
        %vm1396 = vweird.f32 %v1375
        %vm1397 = vweird.f32 %v1391
        %vm1398 = vmor %vm1396, %vm1397
        %v1399 = vsel %vm1398, %v1391, %v1395
        %v1400 = vand.u32 2147483647, %v1375
        %vm1401 = vcmp.eq.f32.partialorder %v1400, 8.507059e+37
        %v1402 = vand.u32 %v1375, 2147483648
        %v1403 = vor.u32 1.1754944e-38, %v1402
        %v1404 = vsel %vm1401, %v1403, %v1399
        %v1405 = vmul.f32 1.0, %v1404
        %v1406 = vperm.slane %v1390, 0
        %v1407 = vperm.slane %v1405, 0
        %v1408 = vmul.f32 %v399, %v1406
        %v1409 = vmul.f32 %v400, %v1407
        %v1410 = vmul.f32 %v401, %v1406
        %v1411 = vmul.f32 %v402, %v1407
        %v1412 = vld [vmem:[%s230] sm:$0xff]
        %v1413 = vld [vmem:[%s230 + $0x8] sm:$0xff]
        %v1414 = vld [vmem:[%s230 + $0x10] sm:$0xff]
        %v1415 = vld [vmem:[%s230 + $0x18] sm:$0xff]
        %v1416 = vadd.f32 %v1408, %v1412
        %v1417 = vadd.f32 %v1409, %v1413
        %v1418 = vadd.f32 %v1410, %v1414
        %v1419 = vadd.f32 %v1411, %v1415
        %1420 = vst [vmem:[%s262] sm:$0xff] %v1416
        %1421 = vst [vmem:[%s262 + $0x8] sm:$0xff] %v1417
        %1422 = vst [vmem:[%s262 + $0x10] sm:$0xff] %v1418
        %1423 = vst [vmem:[%s262 + $0x18] sm:$0xff] %v1419
        %s1424 = sand.u32 %s142, 1
        %s1425 = scalar_lea.sflag [#allocation6], %s1424
        %s1426 = sand.u32 %s142, 1
        %s1427 = smul.addr %s1426, 32
        %s1428 = scalar_lea.vmem [#allocation9], %s1427
        // Predicated region
        $region49: #{tpu_custom_call.1} parent=39 // pred_check
          %p1429 = pneg %p152
        $region50: #{tpu_custom_call.1} parent=39 // pred_check_branch
          %1431 = sbr.rel (%p1429) target = $region52
        $region51: #{tpu_custom_call.1} parent=39 // pred_region
          %1433 = vsyncadd %s1425, 0
          %s1434 = smul.addr %s24, 4
          %s1435 = smul.addr %s1434, 8
          %s1436 = scalar_lea.hbm %s5, %s1435
          %s1437 = sshll.u32 %s1428, 4
          %s1438 = int_to_ptr.vmem [resolvable:$true] %s1437
          %s1439 = sshll.u32 %s1436, 4
          %s1440 = int_to_ptr.hbm [resolvable:$true] %s1439
          %1445 = dma.vmem_to_hbm [thread:$0]  %s1438, 512, %s1440, %s1425, 256, 256, 16
        $region52: #{tpu_custom_call.1} parent=39 // pred_fallthru
          _
      $region40: #{tpu_custom_call.1} parent=5 // pred_fallthru
        _
      %p1446 = scmp.le.s32.totalorder 2, %s19
      // Predicated region
      $region53: #{tpu_custom_call.1} parent=5 // pred_check
        %p1447 = pneg %p1446
      $region54: #{tpu_custom_call.1} parent=5 // pred_check_branch
        %1449 = sbr.rel (%p1447) target = $region56
      $region55: #{tpu_custom_call.1} parent=5 // pred_region
        %s1450 = ssub.s32 %s19, 2
        // Predicated region
        $region57: #{tpu_custom_call.1} parent=55 // pred_check
          %p1451 = pneg %p158
        $region58: #{tpu_custom_call.1} parent=55 // pred_check_branch
          %1453 = sbr.rel (%p1451) target = $region60
        $region59: #{tpu_custom_call.1} parent=55 // pred_region
          %s1454 = sand.u32 %s143, 1
          %s1455 = scalar_lea.sflag [#allocation6], %s1454
          %s1456 = sand.u32 %s143, 1
          %s1457 = smul.addr %s1456, 32
          %s1458 = scalar_lea.vmem [#allocation9], %s1457
          %1460 = dma.done %s1455, 512
        $region60: #{tpu_custom_call.1} parent=55 // pred_fallthru
          _
      $region56: #{tpu_custom_call.1} parent=5 // pred_fallthru
        _
    $region6: #{tpu_custom_call.1} parent=1 // loop_footer
      %s23 = sadd.s32 1, %s19
    $region7: #{tpu_custom_call.1} parent=1 // loop_footer_branch
      %18 = sbr.rel target = $region3
    $region8: #{tpu_custom_call.1} parent=1 // loop_exit
      _
    %1461 = vsyncpa [#allocation5], 1
    %s1462 = scalar_lea.sflag [#allocation5], 1
    %1463 = vsyncpa %s1462, 1
    %1464 = vsyncpa [#allocation8], 1
    %1465 = vsyncpa [#allocation6], 1
    %s1466 = scalar_lea.sflag [#allocation6], 1
    %1467 = vsyncpa %s1466, 1

</llo_original>
